<compile_context>
chip_gen: v5e
topology: v5e:2x2
jax: 0.10.0
libtpu: 0.0.40
codegen_flags: <defaults>
</compile_context>

<pallas_src>
import functools

import jax
import jax.numpy as jnp
from jax.experimental import pallas as pl
from jax.experimental.pallas import tpu as pltpu

EPS = 1e-5
LEAKY_SLOPE = 0.01


def _round_up(x, m):
    return ((x + m - 1) // m) * m


def _edge_apply_kernel(inv_n,
                       srcp_ref, efp_ref, dstp_ref,
                       w_src_cat_ref, w_e_cat_ref, w_dst_cat_ref,
                       sel_n_ref, sel_e_ref, w_attn_ref,
                       wsum_ref, bias_ref,
                       efeat_ref, attn_ref):
    f32 = jnp.float32
    pn = efeat_ref.shape[-1]              # p * n_out_pad (multiple of 128)

    srcp = srcp_ref[...].astype(f32)      # (R, p*d_n)  p packed edges per row
    efp = efp_ref[...].astype(f32)        # (R, p*d_e)
    dstp = dstp_ref[...].astype(f32)      # (R, p*d_n)

    # One fused MXU pass per input computes BOTH x@W and the per-edge feature
    # sum: columns [0, pn) of each concatenated weight hold the block-diagonal
    # Linear row-block, columns [pn, 2*pn) hold the block-diagonal all-ones
    # selector (result already broadcast over each edge's n_out-wide lane
    # group, so no cross-lane reshapes/reductions are needed in-kernel).
    r = (jnp.dot(srcp, w_src_cat_ref[...], preferred_element_type=f32)
         + jnp.dot(efp, w_e_cat_ref[...], preferred_element_type=f32)
         + jnp.dot(dstp, w_dst_cat_ref[...], preferred_element_type=f32))
    xw = r[:, :pn]                        # x @ W        (128-aligned lane slice)
    s1 = r[:, pn:]                        # per-edge sum of features

    # Sum of squares: src/dst share the same selector -> merge on the VPU
    # before the MXU push (2 stats dots instead of 6).
    sd2 = srcp * srcp + dstp * dstp
    s2 = (jnp.dot(sd2, sel_n_ref[...], preferred_element_type=f32)
          + jnp.dot(efp * efp, sel_e_ref[...], preferred_element_type=f32))

    mean = s1 * inv_n
    var = jnp.maximum(s2 * inv_n - mean * mean, 0.0)       # biased variance
    inv_std = jax.lax.rsqrt(var + EPS)

    # InstanceNorm folded into the Linear layer:
    #   ((x - mean) * inv_std) @ W + b
    #     = inv_std * (x @ W) - (inv_std * mean) * colsum(W) + b
    h = inv_std * xw - (inv_std * mean) * wsum_ref[...] + bias_ref[...]
    h = jnp.where(h > 0, h, LEAKY_SLOPE * h)               # LeakyReLU(0.01)
    efeat_ref[...] = h.astype(efeat_ref.dtype)             # lane-dense store

    # attn = h @ w_attn (bias-free), packed layout: column k of block-diagonal
    # w_attn extracts edge-group k's scalar attention.
    attn = jnp.dot(h, w_attn_ref[...], preferred_element_type=f32)
    attn_ref[...] = attn.astype(attn_ref.dtype)


def edge_apply_forward(src_nfeat, efeat, dst_nfeat, w, b, w_attn, *, tile_e=4096):
    """EdgeApplyModule forward (LSTM=False).

    src_nfeat, dst_nfeat: (E, d_n); efeat: (E, d_e)
    w: (n_in, n_out)   -- already transposed vs. torch Linear.weight
    b: (n_out,)        -- Linear bias
    w_attn: (n_out, 1) -- attention head, no bias

    Outputs follow the input dtype; pass bf16 inputs to halve HBM traffic on
    this bandwidth-bound kernel (internal math stays f32).
    """
    E, d_n = src_nfeat.shape
    _, d_e = efeat.shape
    n_in = 2 * d_n + d_e
    n_out = w.shape[1]
    assert w.shape == (n_in, n_out)

    out_dtype = jnp.result_type(src_nfeat.dtype, efeat.dtype, dst_nfeat.dtype)
    f32 = jnp.float32

    # ---- lane packing: p edges share one 128-lane output row ----------------
    # Pad n_out with zero weight/bias columns so it always divides (or is a
    # multiple of) 128; efeat stores are then unmasked full-lane vst's.
    if n_out <= 128:
        n_out_pad = pl.next_power_of_2(n_out)    # divisors of 128 are powers of 2
        p = 128 // n_out_pad
    else:
        n_out_pad = _round_up(n_out, 128)
        p = 1
    pn = p * n_out_pad                           # packed lane width (mult of 128)

    # ---- edge tiling ---------------------------------------------------------
    # Big tiles amortize the ~0.35 us/step pipeline overhead; keep >= 4 grid
    # steps when there is enough work so both v7x TensorCores get a share of
    # the "parallel" grid axis, and keep padding to < one tile.
    unit = 8 * p                                  # packed sublane granularity
    E_unit = _round_up(max(E, 1), unit)
    n_steps = max(4, -(-E_unit // max(int(tile_e), unit)))
    n_steps = max(1, min(n_steps, E_unit // unit))
    tile_e = _round_up(-(-E_unit // n_steps), unit)
    E_pad = _round_up(E, tile_e)
    grid = (E_pad // tile_e,)

    if E_pad != E:
        # Zero padding keeps padded rows finite (var=0 -> rsqrt(eps)); padded
        # rows are sliced off below.
        pad = ((0, E_pad - E), (0, 0))
        src_nfeat = jnp.pad(src_nfeat, pad)
        efeat = jnp.pad(efeat, pad)
        dst_nfeat = jnp.pad(dst_nfeat, pad)

    R_total = E_pad // p                          # packed rows overall
    R_tile = tile_e // p                          # packed rows per grid step

    # Free (metadata-only, row-major) reshapes: p consecutive edges per row.
    srcp = src_nfeat.reshape(R_total, p * d_n)
    efp = efeat.reshape(R_total, p * d_e)
    dstp = dst_nfeat.reshape(R_total, p * d_n)

    # ---- parameter packs (tiny; built once per call) -------------------------
    w_f = w.astype(f32)
    b_f = b.astype(f32)
    wa_f = w_attn.astype(f32)
    if n_out_pad != n_out:
        w_f = jnp.pad(w_f, ((0, 0), (0, n_out_pad - n_out)))
        b_f = jnp.pad(b_f, ((0, n_out_pad - n_out),))
        wa_f = jnp.pad(wa_f, ((0, n_out_pad - n_out), (0, 0)))

    eye_p = jnp.eye(p, dtype=f32)
    w_src_bd = jnp.kron(eye_p, w_f[:d_n])                         # (p*d_n, pn)
    w_e_bd = jnp.kron(eye_p, w_f[d_n:d_n + d_e])                  # (p*d_e, pn)
    w_dst_bd = jnp.kron(eye_p, w_f[d_n + d_e:])                   # (p*d_n, pn)
    sel_n = jnp.kron(eye_p, jnp.ones((d_n, n_out_pad), f32))      # (p*d_n, pn)
    sel_e = jnp.kron(eye_p, jnp.ones((d_e, n_out_pad), f32))      # (p*d_e, pn)
    # 256-wide fused weights: [W-block | selector] -> one MXU pass per input.
    w_src_cat = jnp.concatenate([w_src_bd, sel_n], axis=1)        # (p*d_n, 2*pn)
    w_e_cat = jnp.concatenate([w_e_bd, sel_e], axis=1)            # (p*d_e, 2*pn)
    w_dst_cat = jnp.concatenate([w_dst_bd, sel_n], axis=1)        # (p*d_n, 2*pn)
    w_attn_bd = jnp.kron(eye_p, wa_f)                             # (pn, p)
    wsum = jnp.tile(jnp.sum(w_f, axis=0), p).reshape(1, pn)
    bias = jnp.tile(b_f, p).reshape(1, pn)

    kernel = functools.partial(_edge_apply_kernel, 1.0 / float(n_in))

    row_spec_n = pl.BlockSpec((R_tile, p * d_n), lambda i: (i, 0))
    row_spec_e = pl.BlockSpec((R_tile, p * d_e), lambda i: (i, 0))
    const = lambda i: (0, 0)        # constant block index: weights fetched once

    # Advisory cost estimate (memory-bound kernel; helps XLA schedule around it).
    def _nbytes(a):
        return int(a.size) * a.dtype.itemsize
    itemsize_out = jnp.dtype(out_dtype).itemsize
    flops = int(R_total) * (4 * pn * p * n_in            # fused x@[W|sel] dots
                            + 2 * pn * p * (d_n + d_e)   # sum-of-squares dots
                            + 2 * pn * p                 # attn head
                            + 12 * pn)                   # elementwise epilogue
    transcendentals = int(R_total) * pn                  # rsqrt
    bytes_accessed = (_nbytes(srcp) + _nbytes(efp) + _nbytes(dstp)
                      + _nbytes(w_src_cat) + _nbytes(w_e_cat) + _nbytes(w_dst_cat)
                      + _nbytes(sel_n) + _nbytes(sel_e) + _nbytes(w_attn_bd)
                      + _nbytes(wsum) + _nbytes(bias)
                      + int(R_total) * (pn + p) * itemsize_out)

    efeat_pk, attn_pk = pl.pallas_call(
        kernel,
        out_shape=(
            jax.ShapeDtypeStruct((R_total, pn), out_dtype),   # lane-dense efeat
            jax.ShapeDtypeStruct((R_total, p), out_dtype),    # packed attn
        ),
        grid_spec=pltpu.PrefetchScalarGridSpec(
            num_scalar_prefetch=0,
            grid=grid,
            in_specs=[
                row_spec_n, row_spec_e, row_spec_n,
                pl.BlockSpec((p * d_n, 2 * pn), const),   # w_src_cat
                pl.BlockSpec((p * d_e, 2 * pn), const),   # w_e_cat
                pl.BlockSpec((p * d_n, 2 * pn), const),   # w_dst_cat
                pl.BlockSpec((p * d_n, pn), const),       # sel_n
                pl.BlockSpec((p * d_e, pn), const),       # sel_e
                pl.BlockSpec((pn, p), const),             # w_attn_bd
                pl.BlockSpec((1, pn), const),             # colsum(W) tile
                pl.BlockSpec((1, pn), const),             # bias tile
            ],
            out_specs=[
                pl.BlockSpec((R_tile, pn), lambda i: (i, 0)),
                pl.BlockSpec((R_tile, p), lambda i: (i, 0)),
            ],
        ),
        compiler_params=pltpu.CompilerParams(
            dimension_semantics=("parallel",),
            vmem_limit_bytes=32 * 1024 * 1024),   # v5e default (16 MiB) is too
                                                  # small for the enlarged tile
        cost_estimate=pl.CostEstimate(flops=flops,
                                      transcendentals=transcendentals,
                                      bytes_accessed=bytes_accessed),
    )(srcp, efp, dstp, w_src_cat, w_e_cat, w_dst_cat, sel_n, sel_e, w_attn_bd,
      wsum, bias)

    # Free reshapes back to edge-major; slice off edge/column padding.
    efeat_out = efeat_pk.reshape(E_pad, n_out_pad)[:E, :n_out]
    attn_out = attn_pk.reshape(E_pad, 1)[:E]
    return {"efeat": efeat_out, "attn": attn_out}


def reference_forward(src_nfeat, efeat, dst_nfeat, w, b, w_attn):
    x = jnp.concatenate([src_nfeat, efeat, dst_nfeat], axis=1).astype(jnp.float32)
    mean = jnp.mean(x, axis=1, keepdims=True)
    var = jnp.mean((x - mean) ** 2, axis=1, keepdims=True)
    xn = (x - mean) / jnp.sqrt(var + EPS)
    h = jnp.dot(xn, w, precision=jax.lax.Precision.HIGHEST) + b
    h = jnp.where(h > 0, h, LEAKY_SLOPE * h)
    attn = jnp.dot(h, w_attn, precision=jax.lax.Precision.HIGHEST)
    return {"efeat": h, "attn": attn}


def _run_case(key, E, d_n, d_e, n_out):
    n_in = 2 * d_n + d_e
    k1, k2, k3, k4, k5, k6 = jax.random.split(key, 6)
    src_nfeat = jax.random.normal(k1, (E, d_n), dtype=jnp.float32)
    efeat = jax.random.normal(k2, (E, d_e), dtype=jnp.float32)
    dst_nfeat = jax.random.normal(k3, (E, d_n), dtype=jnp.float32)

    bound_lin = 1.0 / (n_in ** 0.5)
    w = jax.random.uniform(k4, (n_in, n_out), minval=-bound_lin, maxval=bound_lin,
                           dtype=jnp.float32)
    b = jax.random.uniform(k5, (n_out,), minval=-bound_lin, maxval=bound_lin,
                           dtype=jnp.float32)
    bound_attn = 1.0 / (n_out ** 0.5)
    w_attn = jax.random.uniform(k6, (n_out, 1), minval=-bound_attn, maxval=bound_attn,
                                dtype=jnp.float32)

    out = edge_apply_forward(src_nfeat, efeat, dst_nfeat, w, b, w_attn)
    jax.block_until_ready(out)

    ref = reference_forward(src_nfeat, efeat, dst_nfeat, w, b, w_attn)
    assert out["efeat"].shape == (E, n_out) and out["attn"].shape == (E, 1)
    assert jnp.allclose(out["efeat"], ref["efeat"], atol=2e-4, rtol=2e-4)
    assert jnp.allclose(out["attn"], ref["attn"], atol=2e-4, rtol=2e-4)


if __name__ == "__main__":
    key = jax.random.PRNGKey(0)
    ka, kb = jax.random.split(key, 2)

    # Case 1: n_out divides 128 (p=4 lane packing); E deliberately NOT a tile
    # multiple to exercise the edge-padding path.
    _run_case(ka, E=1000, d_n=16, d_e=16, n_out=32)

    # Case 2: n_out does NOT divide 128 -> zero-padded output columns keep the
    # lane-packed (unmasked-store) path; also exercises d_n != d_e.
    _run_case(kb, E=200, d_n=12, d_e=8, n_out=24)

    print("KERNEL_OK")
</pallas_src>

<mosaic_0001>
module attributes {stable_mosaic.version = 11 : i64} {
  func.func @_edge_apply_kernel(%arg0: i32, %arg1: memref<64x64xf32, #tpu.memory_space<vmem>>, %arg2: memref<64x64xf32, #tpu.memory_space<vmem>>, %arg3: memref<64x64xf32, #tpu.memory_space<vmem>>, %arg4: memref<64x256xf32, #tpu.memory_space<vmem>>, %arg5: memref<64x256xf32, #tpu.memory_space<vmem>>, %arg6: memref<64x256xf32, #tpu.memory_space<vmem>>, %arg7: memref<64x128xf32, #tpu.memory_space<vmem>>, %arg8: memref<64x128xf32, #tpu.memory_space<vmem>>, %arg9: memref<128x4xf32, #tpu.memory_space<vmem>>, %arg10: memref<1x128xf32, #tpu.memory_space<vmem>>, %arg11: memref<1x128xf32, #tpu.memory_space<vmem>>, %arg12: memref<64x128xf32, #tpu.memory_space<vmem>>, %arg13: memref<64x4xf32, #tpu.memory_space<vmem>>) attributes {dimension_semantics = [#tpu.dimension_semantics<parallel>], iteration_bounds = array<i64: 4>, scalar_prefetch = 0 : i64, scratch_operands = 0 : i64, tpu.core_type = #tpu.core_type<tc>, window_params = [{transform_indices = @transform_0, window_bounds = array<i64: 64, 64>}, {transform_indices = @transform_1, window_bounds = array<i64: 64, 64>}, {transform_indices = @transform_2, window_bounds = array<i64: 64, 64>}, {pipeline_mode = #tpu.pipeline_mode<synchronous>, transform_indices = @transform_3, window_bounds = array<i64: 64, 256>}, {pipeline_mode = #tpu.pipeline_mode<synchronous>, transform_indices = @transform_4, window_bounds = array<i64: 64, 256>}, {pipeline_mode = #tpu.pipeline_mode<synchronous>, transform_indices = @transform_5, window_bounds = array<i64: 64, 256>}, {pipeline_mode = #tpu.pipeline_mode<synchronous>, transform_indices = @transform_6, window_bounds = array<i64: 64, 128>}, {pipeline_mode = #tpu.pipeline_mode<synchronous>, transform_indices = @transform_7, window_bounds = array<i64: 64, 128>}, {pipeline_mode = #tpu.pipeline_mode<synchronous>, transform_indices = @transform_8, window_bounds = array<i64: 128, 4>}, {pipeline_mode = #tpu.pipeline_mode<synchronous>, transform_indices = @transform_9, window_bounds = array<i64: 1, 128>}, {pipeline_mode = #tpu.pipeline_mode<synchronous>, transform_indices = @transform_10, window_bounds = array<i64: 1, 128>}, {transform_indices = @transform_11, window_bounds = array<i64: 64, 128>}, {transform_indices = @transform_12, window_bounds = array<i64: 64, 4>}]} {
    %c0 = arith.constant 0 : index
    %c0_0 = arith.constant 0 : index
    %0 = vector.load %arg1[%c0, %c0_0] : memref<64x64xf32, #tpu.memory_space<vmem>>, vector<64x64xf32>
    %c0_1 = arith.constant 0 : index
    %c0_2 = arith.constant 0 : index
    %1 = vector.load %arg2[%c0_1, %c0_2] : memref<64x64xf32, #tpu.memory_space<vmem>>, vector<64x64xf32>
    %c0_3 = arith.constant 0 : index
    %c0_4 = arith.constant 0 : index
    %2 = vector.load %arg3[%c0_3, %c0_4] : memref<64x64xf32, #tpu.memory_space<vmem>>, vector<64x64xf32>
    %c0_5 = arith.constant 0 : index
    %c0_6 = arith.constant 0 : index
    %3 = vector.load %arg4[%c0_5, %c0_6] : memref<64x256xf32, #tpu.memory_space<vmem>>, vector<64x256xf32>
    %cst = arith.constant dense<0.000000e+00> : vector<64x256xf32>
    %4 = tpu.matmul %0, %3, %cst {dimension_numbers = #tpu.dot_dimension_numbers<[1], [0], [0], [1], [0, 0, 1, 1], [], []>} : vector<64x64xf32>, vector<64x256xf32>, vector<64x256xf32> -> vector<64x256xf32>
    %c0_7 = arith.constant 0 : index
    %c0_8 = arith.constant 0 : index
    %5 = vector.load %arg5[%c0_7, %c0_8] : memref<64x256xf32, #tpu.memory_space<vmem>>, vector<64x256xf32>
    %cst_9 = arith.constant dense<0.000000e+00> : vector<64x256xf32>
    %6 = tpu.matmul %1, %5, %cst_9 {dimension_numbers = #tpu.dot_dimension_numbers<[1], [0], [0], [1], [0, 0, 1, 1], [], []>} : vector<64x64xf32>, vector<64x256xf32>, vector<64x256xf32> -> vector<64x256xf32>
    %7 = arith.addf %4, %6 : vector<64x256xf32>
    %c0_10 = arith.constant 0 : index
    %c0_11 = arith.constant 0 : index
    %8 = vector.load %arg6[%c0_10, %c0_11] : memref<64x256xf32, #tpu.memory_space<vmem>>, vector<64x256xf32>
    %cst_12 = arith.constant dense<0.000000e+00> : vector<64x256xf32>
    %9 = tpu.matmul %2, %8, %cst_12 {dimension_numbers = #tpu.dot_dimension_numbers<[1], [0], [0], [1], [0, 0, 1, 1], [], []>} : vector<64x64xf32>, vector<64x256xf32>, vector<64x256xf32> -> vector<64x256xf32>
    %10 = arith.addf %7, %9 : vector<64x256xf32>
    %11 = vector.extract_strided_slice %10 {offsets = [0, 0], sizes = [64, 128], strides = [1, 1]} : vector<64x256xf32> to vector<64x128xf32>
    %12 = vector.extract_strided_slice %10 {offsets = [0, 128], sizes = [64, 128], strides = [1, 1]} : vector<64x256xf32> to vector<64x128xf32>
    %13 = arith.mulf %0, %0 : vector<64x64xf32>
    %14 = arith.mulf %2, %2 : vector<64x64xf32>
    %15 = arith.addf %13, %14 : vector<64x64xf32>
    %c0_13 = arith.constant 0 : index
    %c0_14 = arith.constant 0 : index
    %16 = vector.load %arg7[%c0_13, %c0_14] : memref<64x128xf32, #tpu.memory_space<vmem>>, vector<64x128xf32>
    %cst_15 = arith.constant dense<0.000000e+00> : vector<64x128xf32>
    %17 = tpu.matmul %15, %16, %cst_15 {dimension_numbers = #tpu.dot_dimension_numbers<[1], [0], [0], [1], [0, 0, 1, 1], [], []>} : vector<64x64xf32>, vector<64x128xf32>, vector<64x128xf32> -> vector<64x128xf32>
    %18 = arith.mulf %1, %1 : vector<64x64xf32>
    %c0_16 = arith.constant 0 : index
    %c0_17 = arith.constant 0 : index
    %19 = vector.load %arg8[%c0_16, %c0_17] : memref<64x128xf32, #tpu.memory_space<vmem>>, vector<64x128xf32>
    %cst_18 = arith.constant dense<0.000000e+00> : vector<64x128xf32>
    %20 = tpu.matmul %18, %19, %cst_18 {dimension_numbers = #tpu.dot_dimension_numbers<[1], [0], [0], [1], [0, 0, 1, 1], [], []>} : vector<64x64xf32>, vector<64x128xf32>, vector<64x128xf32> -> vector<64x128xf32>
    %21 = arith.addf %17, %20 : vector<64x128xf32>
    %cst_19 = arith.constant 0.020833334 : f32
    %22 = vector.broadcast %cst_19 : f32 to vector<64x128xf32>
    %23 = arith.mulf %12, %22 : vector<64x128xf32>
    %cst_20 = arith.constant 0.020833334 : f32
    %24 = vector.broadcast %cst_20 : f32 to vector<64x128xf32>
    %25 = arith.mulf %21, %24 : vector<64x128xf32>
    %26 = arith.mulf %23, %23 : vector<64x128xf32>
    %27 = arith.subf %25, %26 : vector<64x128xf32>
    %cst_21 = arith.constant 0.000000e+00 : f32
    %28 = vector.broadcast %cst_21 : f32 to vector<64x128xf32>
    %29 = arith.maximumf %27, %28 : vector<64x128xf32>
    %cst_22 = arith.constant 9.99999974E-6 : f32
    %30 = vector.broadcast %cst_22 : f32 to vector<64x128xf32>
    %31 = arith.addf %29, %30 : vector<64x128xf32>
    %32 = math.rsqrt %31 : vector<64x128xf32>
    %33 = arith.mulf %32, %11 : vector<64x128xf32>
    %34 = arith.mulf %32, %23 : vector<64x128xf32>
    %c0_23 = arith.constant 0 : index
    %c0_24 = arith.constant 0 : index
    %35 = vector.load %arg10[%c0_23, %c0_24] : memref<1x128xf32, #tpu.memory_space<vmem>>, vector<1x128xf32>
    %36 = vector.broadcast %35 : vector<1x128xf32> to vector<64x128xf32>
    %37 = arith.mulf %34, %36 : vector<64x128xf32>
    %38 = arith.subf %33, %37 : vector<64x128xf32>
    %c0_25 = arith.constant 0 : index
    %c0_26 = arith.constant 0 : index
    %39 = vector.load %arg11[%c0_25, %c0_26] : memref<1x128xf32, #tpu.memory_space<vmem>>, vector<1x128xf32>
    %40 = vector.broadcast %39 : vector<1x128xf32> to vector<64x128xf32>
    %41 = arith.addf %38, %40 : vector<64x128xf32>
    %cst_27 = arith.constant 0.000000e+00 : f32
    %42 = vector.broadcast %cst_27 : f32 to vector<64x128xf32>
    %43 = arith.cmpf ogt, %41, %42 : vector<64x128xf32>
    %cst_28 = arith.constant 0.00999999977 : f32
    %44 = vector.broadcast %cst_28 : f32 to vector<64x128xf32>
    %45 = arith.mulf %44, %41 : vector<64x128xf32>
    %46 = arith.select %43, %41, %45 : vector<64x128xi1>, vector<64x128xf32>
    %c0_29 = arith.constant 0 : index
    %c0_30 = arith.constant 0 : index
    %47 = vector.load %arg12[%c0_29, %c0_30] : memref<64x128xf32, #tpu.memory_space<vmem>>, vector<64x128xf32>
    tpu.vector_store %arg12[%c0_29, %c0_30], %46 {strides = array<i32>} : memref<64x128xf32, #tpu.memory_space<vmem>>, vector<64x128xf32>,
    %c0_31 = arith.constant 0 : index
    %c0_32 = arith.constant 0 : index
    %48 = vector.load %arg9[%c0_31, %c0_32] : memref<128x4xf32, #tpu.memory_space<vmem>>, vector<128x4xf32>
    %cst_33 = arith.constant dense<0.000000e+00> : vector<64x4xf32>
    %49 = tpu.matmul %46, %48, %cst_33 {dimension_numbers = #tpu.dot_dimension_numbers<[1], [0], [0], [1], [0, 0, 1, 1], [], []>} : vector<64x128xf32>, vector<128x4xf32>, vector<64x4xf32> -> vector<64x4xf32>
    %c0_34 = arith.constant 0 : index
    %c0_35 = arith.constant 0 : index
    %50 = vector.load %arg13[%c0_34, %c0_35] : memref<64x4xf32, #tpu.memory_space<vmem>>, vector<64x4xf32>
    tpu.vector_store %arg13[%c0_34, %c0_35], %49 {strides = array<i32>} : memref<64x4xf32, #tpu.memory_space<vmem>>, vector<64x4xf32>,
    return
  }
  func.func @transform_0(%arg0: i32) -> (i32, i32) {
    %c0_i32 = arith.constant 0 : i32
    %c0_i32_0 = arith.constant 0 : i32
    return %arg0, %c0_i32 : i32, i32
  }
  func.func @transform_1(%arg0: i32) -> (i32, i32) {
    %c0_i32 = arith.constant 0 : i32
    %c0_i32_0 = arith.constant 0 : i32
    return %arg0, %c0_i32 : i32, i32
  }
  func.func @transform_2(%arg0: i32) -> (i32, i32) {
    %c0_i32 = arith.constant 0 : i32
    %c0_i32_0 = arith.constant 0 : i32
    return %arg0, %c0_i32 : i32, i32
  }
  func.func @transform_3(%arg0: i32) -> (i32, i32) {
    %c0_i32 = arith.constant 0 : i32
    %c0_i32_0 = arith.constant 0 : i32
    %c0_i32_1 = arith.constant 0 : i32
    return %c0_i32, %c0_i32_0 : i32, i32
  }
  func.func @transform_4(%arg0: i32) -> (i32, i32) {
    %c0_i32 = arith.constant 0 : i32
    %c0_i32_0 = arith.constant 0 : i32
    %c0_i32_1 = arith.constant 0 : i32
    return %c0_i32, %c0_i32_0 : i32, i32
  }
  func.func @transform_5(%arg0: i32) -> (i32, i32) {
    %c0_i32 = arith.constant 0 : i32
    %c0_i32_0 = arith.constant 0 : i32
    %c0_i32_1 = arith.constant 0 : i32
    return %c0_i32, %c0_i32_0 : i32, i32
  }
  func.func @transform_6(%arg0: i32) -> (i32, i32) {
    %c0_i32 = arith.constant 0 : i32
    %c0_i32_0 = arith.constant 0 : i32
    %c0_i32_1 = arith.constant 0 : i32
    return %c0_i32, %c0_i32_0 : i32, i32
  }
  func.func @transform_7(%arg0: i32) -> (i32, i32) {
    %c0_i32 = arith.constant 0 : i32
    %c0_i32_0 = arith.constant 0 : i32
    %c0_i32_1 = arith.constant 0 : i32
    return %c0_i32, %c0_i32_0 : i32, i32
  }
  func.func @transform_8(%arg0: i32) -> (i32, i32) {
    %c0_i32 = arith.constant 0 : i32
    %c0_i32_0 = arith.constant 0 : i32
    %c0_i32_1 = arith.constant 0 : i32
    return %c0_i32, %c0_i32_0 : i32, i32
  }
  func.func @transform_9(%arg0: i32) -> (i32, i32) {
    %c0_i32 = arith.constant 0 : i32
    %c0_i32_0 = arith.constant 0 : i32
    %c0_i32_1 = arith.constant 0 : i32
    return %c0_i32, %c0_i32_0 : i32, i32
  }
  func.func @transform_10(%arg0: i32) -> (i32, i32) {
    %c0_i32 = arith.constant 0 : i32
    %c0_i32_0 = arith.constant 0 : i32
    %c0_i32_1 = arith.constant 0 : i32
    return %c0_i32, %c0_i32_0 : i32, i32
  }
  func.func @transform_11(%arg0: i32) -> (i32, i32) {
    %c0_i32 = arith.constant 0 : i32
    %c0_i32_0 = arith.constant 0 : i32
    return %arg0, %c0_i32 : i32, i32
  }
  func.func @transform_12(%arg0: i32) -> (i32, i32) {
    %c0_i32 = arith.constant 0 : i32
    %c0_i32_0 = arith.constant 0 : i32
    return %arg0, %c0_i32 : i32, i32
  }
}

</mosaic_0001>

<llo_original>
// kernel: tpu_custom_call.1
$region0: #{tpu_custom_call.1}
  #allocation0 [shape = 'u32[]', space=smem, size = 0x4, offset = 0x4, fixed_abs, tag = 'smem constant byte address 0x4 - core index']
  #allocation1 [shape = 'u32[72,128]{1,0:T(1,128)}', space=vmem, size = 0x9000, scoped, tag = 'internal scratch']
  %s0 = inlined_call_operand.vmem [shape: f32[256,64], index: 0, kind: input, shape index: {}]
  %s1 = inlined_call_operand.vmem [shape: f32[256,64], index: 1, kind: input, shape index: {}]
  %s2 = inlined_call_operand.vmem [shape: f32[256,64], index: 2, kind: input, shape index: {}]
  %s3 = inlined_call_operand.vmem [shape: f32[64,256], index: 3, kind: input, shape index: {}]
  %s4 = inlined_call_operand.vmem [shape: f32[64,256], index: 4, kind: input, shape index: {}]
  %s5 = inlined_call_operand.vmem [shape: f32[64,256], index: 5, kind: input, shape index: {}]
  %s6 = inlined_call_operand.vmem [shape: f32[64,128], index: 6, kind: input, shape index: {}]
  %s7 = inlined_call_operand.vmem [shape: f32[64,128], index: 7, kind: input, shape index: {}]
  %s8 = inlined_call_operand.vmem [shape: f32[128,4], index: 8, kind: input, shape index: {}]
  %s9 = inlined_call_operand.vmem [shape: f32[1,128], index: 9, kind: input, shape index: {}]
  %s10 = inlined_call_operand.vmem [shape: f32[1,128], index: 10, kind: input, shape index: {}]
  %s11 = inlined_call_operand.hbm [shape: f32[256,128], index: 11, kind: output, shape index: {0}]
  %s12 = inlined_call_operand.vmem [shape: f32[256,4], index: 12, kind: output, shape index: {1}]
  %13 = xla_tuple %s11, %s12
  %s14 = sld [smem:[#allocation0]]
  $region85: #{tpu_custom_call.1} parent=0
    _
  %s16 = ssub.s32 1, %s14
  %s17 = scalar_select 0, %s16, %s14
  $region1: #{tpu_custom_call.1} parent=0
    #allocation2 [shape = 'u8[65536]{0}', space=vmem, size = 0x10000, scoped, tag = 'output window, operand 0']
    #allocation3 [shape = 's32[2]{0}', space=sflag, size = 0x8, scoped, tag = 'scoped memory for tpu_custom_call.1']
    %18 = vsyncpa [#allocation3], 0
    %s19 = scalar_lea.sflag [#allocation3], 1
    %20 = vsyncpa %s19, 0
    loop: start=0, step=1, limit=6
    $region2: #{tpu_custom_call.1} parent=1 // loop_pre_header
      _
    $region3: #{tpu_custom_call.1} parent=1 // loop_header
      %s22 = sphi 0, %s26
      %p23 = scmp.ge.s32.totalorder %s22, 6
      %s32 = sphi 0, %s34
      %s35 = sphi 0, %s32
      %s36 = sphi 0, %s35
      %s52 = sphi 0, %s36
      %s58 = sphi 0, %s60
      %s61 = sphi 0, %s58
      %s62 = sphi 0, %s61
      %s78 = sphi 0, %s62
      %s84 = sphi 0, %s86
      %s87 = sphi 0, %s84
      %s88 = sphi 0, %s87
      %s104 = sphi 0, %s88
      %s108 = sphi 0, %s108
      %s110 = sphi 0, %s108
      %s111 = sphi 0, %s110
      %s125 = sphi 0, %s111
      %s129 = sphi 0, %s129
      %s131 = sphi 0, %s129
      %s132 = sphi 0, %s131
      %s146 = sphi 0, %s132
      %s150 = sphi 0, %s150
      %s152 = sphi 0, %s150
      %s153 = sphi 0, %s152
      %s167 = sphi 0, %s153
      %s171 = sphi 0, %s171
      %s173 = sphi 0, %s171
      %s174 = sphi 0, %s173
      %s188 = sphi 0, %s174
      %s192 = sphi 0, %s192
      %s194 = sphi 0, %s192
      %s195 = sphi 0, %s194
      %s209 = sphi 0, %s195
      %s213 = sphi 0, %s213
      %s215 = sphi 0, %s213
      %s216 = sphi 0, %s215
      %s230 = sphi 0, %s216
      %s234 = sphi 0, %s234
      %s236 = sphi 0, %s234
      %s237 = sphi 0, %s236
      %s251 = sphi 0, %s237
      %s255 = sphi 0, %s255
      %s257 = sphi 0, %s255
      %s258 = sphi 0, %s257
      %s272 = sphi 0, %s258
      %s278 = sphi 0, %s280
      %s281 = sphi 0, %s278
      %s282 = sphi 0, %s281
      %s298 = sphi 0, %s282
      %s304 = sphi 0, %s306
      %s307 = sphi 0, %s304
      %s308 = sphi 0, %s307
      %s324 = sphi 0, %s308
    $region4: #{tpu_custom_call.1} parent=1 // loop_header_branch
      %25 = sbr.rel (%p23) target = $region8
    $region5: #{tpu_custom_call.1} parent=1 // loop_body
      %s27 = ssub.s32 %s22, 1
      %s28 = ssub.s32 %s22, 2
      %s29 = sadd.s32 %s22, 1
      %s30 = ssub.s32 %s22, %s29
      %p31 = scmp.eq.s32.totalorder %s30, 0
      %s33 = sadd.s32 %s32, 1
      %s34 = scalar_select %p31, %s32, %s33
      %p37 = pneg %p31
      %p38 = scmp.eq.s32.totalorder %s22, 3
      %p39 = por %p37, %p38
      %p40 = scmp.ne.s32.totalorder %s32, %s35
      %p41 = scmp.eq.s32.totalorder %s22, 0
      %p42 = por %p40, %p41
      %p43 = scmp.ne.s32.totalorder %s32, %s35
      %p44 = scmp.eq.s32.totalorder %s27, 3
      %p45 = por %p43, %p44
      %p46 = scmp.ne.s32.totalorder %s35, %s36
      %p47 = scmp.eq.s32.totalorder %s27, 0
      %p48 = por %p46, %p47
      %p49 = scmp.ne.s32.totalorder %s35, %s36
      %p50 = scmp.eq.s32.totalorder %s28, 3
      %p51 = por %p49, %p50
      %p53 = scmp.ne.s32.totalorder %s36, %s52
      %p54 = scmp.eq.s32.totalorder %s28, 0
      %p55 = por %p53, %p54
      %s56 = ssub.s32 %s22, %s29
      %p57 = scmp.eq.s32.totalorder %s56, 0
      %s59 = sadd.s32 %s58, 1
      %s60 = scalar_select %p57, %s58, %s59
      %p63 = pneg %p57
      %p64 = scmp.eq.s32.totalorder %s22, 3
      %p65 = por %p63, %p64
      %p66 = scmp.ne.s32.totalorder %s58, %s61
      %p67 = scmp.eq.s32.totalorder %s22, 0
      %p68 = por %p66, %p67
      %p69 = scmp.ne.s32.totalorder %s58, %s61
      %p70 = scmp.eq.s32.totalorder %s27, 3
      %p71 = por %p69, %p70
      %p72 = scmp.ne.s32.totalorder %s61, %s62
      %p73 = scmp.eq.s32.totalorder %s27, 0
      %p74 = por %p72, %p73
      %p75 = scmp.ne.s32.totalorder %s61, %s62
      %p76 = scmp.eq.s32.totalorder %s28, 3
      %p77 = por %p75, %p76
      %p79 = scmp.ne.s32.totalorder %s62, %s78
      %p80 = scmp.eq.s32.totalorder %s28, 0
      %p81 = por %p79, %p80
      %s82 = ssub.s32 %s22, %s29
      %p83 = scmp.eq.s32.totalorder %s82, 0
      %s85 = sadd.s32 %s84, 1
      %s86 = scalar_select %p83, %s84, %s85
      %p89 = pneg %p83
      %p90 = scmp.eq.s32.totalorder %s22, 3
      %p91 = por %p89, %p90
      %p92 = scmp.ne.s32.totalorder %s84, %s87
      %p93 = scmp.eq.s32.totalorder %s22, 0
      %p94 = por %p92, %p93
      %p95 = scmp.ne.s32.totalorder %s84, %s87
      %p96 = scmp.eq.s32.totalorder %s27, 3
      %p97 = por %p95, %p96
      %p98 = scmp.ne.s32.totalorder %s87, %s88
      %p99 = scmp.eq.s32.totalorder %s27, 0
      %p100 = por %p98, %p99
      %p101 = scmp.ne.s32.totalorder %s87, %s88
      %p102 = scmp.eq.s32.totalorder %s28, 3
      %p103 = por %p101, %p102
      %p105 = scmp.ne.s32.totalorder %s88, %s104
      %p106 = scmp.eq.s32.totalorder %s28, 0
      %p107 = por %p105, %p106
      %s109 = sadd.s32 %s108, 1
      %p112 = scmp.eq.s32.totalorder %s22, 3
      %p113 = scmp.ne.s32.totalorder %s108, %s110
      %p114 = scmp.eq.s32.totalorder %s22, 0
      %p115 = por %p113, %p114
      %p116 = scmp.ne.s32.totalorder %s108, %s110
      %p117 = scmp.eq.s32.totalorder %s27, 3
      %p118 = por %p116, %p117
      %p119 = scmp.ne.s32.totalorder %s110, %s111
      %p120 = scmp.eq.s32.totalorder %s27, 0
      %p121 = por %p119, %p120
      %p122 = scmp.ne.s32.totalorder %s110, %s111
      %p123 = scmp.eq.s32.totalorder %s28, 3
      %p124 = por %p122, %p123
      %p126 = scmp.ne.s32.totalorder %s111, %s125
      %p127 = scmp.eq.s32.totalorder %s28, 0
      %p128 = por %p126, %p127
      %s130 = sadd.s32 %s129, 1
      %p133 = scmp.eq.s32.totalorder %s22, 3
      %p134 = scmp.ne.s32.totalorder %s129, %s131
      %p135 = scmp.eq.s32.totalorder %s22, 0
      %p136 = por %p134, %p135
      %p137 = scmp.ne.s32.totalorder %s129, %s131
      %p138 = scmp.eq.s32.totalorder %s27, 3
      %p139 = por %p137, %p138
      %p140 = scmp.ne.s32.totalorder %s131, %s132
      %p141 = scmp.eq.s32.totalorder %s27, 0
      %p142 = por %p140, %p141
      %p143 = scmp.ne.s32.totalorder %s131, %s132
      %p144 = scmp.eq.s32.totalorder %s28, 3
      %p145 = por %p143, %p144
      %p147 = scmp.ne.s32.totalorder %s132, %s146
      %p148 = scmp.eq.s32.totalorder %s28, 0
      %p149 = por %p147, %p148
      %s151 = sadd.s32 %s150, 1
      %p154 = scmp.eq.s32.totalorder %s22, 3
      %p155 = scmp.ne.s32.totalorder %s150, %s152
      %p156 = scmp.eq.s32.totalorder %s22, 0
      %p157 = por %p155, %p156
      %p158 = scmp.ne.s32.totalorder %s150, %s152
      %p159 = scmp.eq.s32.totalorder %s27, 3
      %p160 = por %p158, %p159
      %p161 = scmp.ne.s32.totalorder %s152, %s153
      %p162 = scmp.eq.s32.totalorder %s27, 0
      %p163 = por %p161, %p162
      %p164 = scmp.ne.s32.totalorder %s152, %s153
      %p165 = scmp.eq.s32.totalorder %s28, 3
      %p166 = por %p164, %p165
      %p168 = scmp.ne.s32.totalorder %s153, %s167
      %p169 = scmp.eq.s32.totalorder %s28, 0
      %p170 = por %p168, %p169
      %s172 = sadd.s32 %s171, 1
      %p175 = scmp.eq.s32.totalorder %s22, 3
      %p176 = scmp.ne.s32.totalorder %s171, %s173
      %p177 = scmp.eq.s32.totalorder %s22, 0
      %p178 = por %p176, %p177
      %p179 = scmp.ne.s32.totalorder %s171, %s173
      %p180 = scmp.eq.s32.totalorder %s27, 3
      %p181 = por %p179, %p180
      %p182 = scmp.ne.s32.totalorder %s173, %s174
      %p183 = scmp.eq.s32.totalorder %s27, 0
      %p184 = por %p182, %p183
      %p185 = scmp.ne.s32.totalorder %s173, %s174
      %p186 = scmp.eq.s32.totalorder %s28, 3
      %p187 = por %p185, %p186
      %p189 = scmp.ne.s32.totalorder %s174, %s188
      %p190 = scmp.eq.s32.totalorder %s28, 0
      %p191 = por %p189, %p190
      %s193 = sadd.s32 %s192, 1
      %p196 = scmp.eq.s32.totalorder %s22, 3
      %p197 = scmp.ne.s32.totalorder %s192, %s194
      %p198 = scmp.eq.s32.totalorder %s22, 0
      %p199 = por %p197, %p198
      %p200 = scmp.ne.s32.totalorder %s192, %s194
      %p201 = scmp.eq.s32.totalorder %s27, 3
      %p202 = por %p200, %p201
      %p203 = scmp.ne.s32.totalorder %s194, %s195
      %p204 = scmp.eq.s32.totalorder %s27, 0
      %p205 = por %p203, %p204
      %p206 = scmp.ne.s32.totalorder %s194, %s195
      %p207 = scmp.eq.s32.totalorder %s28, 3
      %p208 = por %p206, %p207
      %p210 = scmp.ne.s32.totalorder %s195, %s209
      %p211 = scmp.eq.s32.totalorder %s28, 0
      %p212 = por %p210, %p211
      %s214 = sadd.s32 %s213, 1
      %p217 = scmp.eq.s32.totalorder %s22, 3
      %p218 = scmp.ne.s32.totalorder %s213, %s215
      %p219 = scmp.eq.s32.totalorder %s22, 0
      %p220 = por %p218, %p219
      %p221 = scmp.ne.s32.totalorder %s213, %s215
      %p222 = scmp.eq.s32.totalorder %s27, 3
      %p223 = por %p221, %p222
      %p224 = scmp.ne.s32.totalorder %s215, %s216
      %p225 = scmp.eq.s32.totalorder %s27, 0
      %p226 = por %p224, %p225
      %p227 = scmp.ne.s32.totalorder %s215, %s216
      %p228 = scmp.eq.s32.totalorder %s28, 3
      %p229 = por %p227, %p228
      %p231 = scmp.ne.s32.totalorder %s216, %s230
      %p232 = scmp.eq.s32.totalorder %s28, 0
      %p233 = por %p231, %p232
      %s235 = sadd.s32 %s234, 1
      %p238 = scmp.eq.s32.totalorder %s22, 3
      %p239 = scmp.ne.s32.totalorder %s234, %s236
      %p240 = scmp.eq.s32.totalorder %s22, 0
      %p241 = por %p239, %p240
      %p242 = scmp.ne.s32.totalorder %s234, %s236
      %p243 = scmp.eq.s32.totalorder %s27, 3
      %p244 = por %p242, %p243
      %p245 = scmp.ne.s32.totalorder %s236, %s237
      %p246 = scmp.eq.s32.totalorder %s27, 0
      %p247 = por %p245, %p246
      %p248 = scmp.ne.s32.totalorder %s236, %s237
      %p249 = scmp.eq.s32.totalorder %s28, 3
      %p250 = por %p248, %p249
      %p252 = scmp.ne.s32.totalorder %s237, %s251
      %p253 = scmp.eq.s32.totalorder %s28, 0
      %p254 = por %p252, %p253
      %s256 = sadd.s32 %s255, 1
      %p259 = scmp.eq.s32.totalorder %s22, 3
      %p260 = scmp.ne.s32.totalorder %s255, %s257
      %p261 = scmp.eq.s32.totalorder %s22, 0
      %p262 = por %p260, %p261
      %p263 = scmp.ne.s32.totalorder %s255, %s257
      %p264 = scmp.eq.s32.totalorder %s27, 3
      %p265 = por %p263, %p264
      %p266 = scmp.ne.s32.totalorder %s257, %s258
      %p267 = scmp.eq.s32.totalorder %s27, 0
      %p268 = por %p266, %p267
      %p269 = scmp.ne.s32.totalorder %s257, %s258
      %p270 = scmp.eq.s32.totalorder %s28, 3
      %p271 = por %p269, %p270
      %p273 = scmp.ne.s32.totalorder %s258, %s272
      %p274 = scmp.eq.s32.totalorder %s28, 0
      %p275 = por %p273, %p274
      %s276 = ssub.s32 %s22, %s29
      %p277 = scmp.eq.s32.totalorder %s276, 0
      %s279 = sadd.s32 %s278, 1
      %s280 = scalar_select %p277, %s278, %s279
      %p283 = pneg %p277
      %p284 = scmp.eq.s32.totalorder %s22, 3
      %p285 = por %p283, %p284
      %p286 = scmp.ne.s32.totalorder %s278, %s281
      %p287 = scmp.eq.s32.totalorder %s22, 0
      %p288 = por %p286, %p287
      %p289 = scmp.ne.s32.totalorder %s278, %s281
      %p290 = scmp.eq.s32.totalorder %s27, 3
      %p291 = por %p289, %p290
      %p292 = scmp.ne.s32.totalorder %s281, %s282
      %p293 = scmp.eq.s32.totalorder %s27, 0
      %p294 = por %p292, %p293
      %p295 = scmp.ne.s32.totalorder %s281, %s282
      %p296 = scmp.eq.s32.totalorder %s28, 3
      %p297 = por %p295, %p296
      %p299 = scmp.ne.s32.totalorder %s282, %s298
      %p300 = scmp.eq.s32.totalorder %s28, 0
      %p301 = por %p299, %p300
      %s302 = ssub.s32 %s22, %s29
      %p303 = scmp.eq.s32.totalorder %s302, 0
      %s305 = sadd.s32 %s304, 1
      %s306 = scalar_select %p303, %s304, %s305
      %p309 = pneg %p303
      %p310 = scmp.eq.s32.totalorder %s22, 3
      %p311 = por %p309, %p310
      %p312 = scmp.ne.s32.totalorder %s304, %s307
      %p313 = scmp.eq.s32.totalorder %s22, 0
      %p314 = por %p312, %p313
      %p315 = scmp.ne.s32.totalorder %s304, %s307
      %p316 = scmp.eq.s32.totalorder %s27, 3
      %p317 = por %p315, %p316
      %p318 = scmp.ne.s32.totalorder %s307, %s308
      %p319 = scmp.eq.s32.totalorder %s27, 0
      %p320 = por %p318, %p319
      %p321 = scmp.ne.s32.totalorder %s307, %s308
      %p322 = scmp.eq.s32.totalorder %s28, 3
      %p323 = por %p321, %p322
      %p325 = scmp.ne.s32.totalorder %s308, %s324
      %p326 = scmp.eq.s32.totalorder %s28, 0
      %p327 = por %p325, %p326
      %p328 = scmp.le.s32.totalorder 1, %s22
      %p329 = scmp.lt.s32.totalorder %s22, 5
      %p330 = pnand %p328, %p329
      %p331 = pneg %p330
      // Predicated region
      $region9: #{tpu_custom_call.1} parent=5 // pred_check
        _
      $region10: #{tpu_custom_call.1} parent=5 // pred_check_branch
        %333 = sbr.rel (%p330) target = $region12
      $region11: #{tpu_custom_call.1} parent=5 // pred_region
        %s334 = ssub.s32 %s22, 1
        // Predicated region
        $region13: #{tpu_custom_call.1} parent=11 // pred_check
          %p335 = pneg %p121
        $region14: #{tpu_custom_call.1} parent=11 // pred_check_branch
          %337 = sbr.rel (%p335) target = $region16
        $region15: #{tpu_custom_call.1} parent=11 // pred_region
          _
        $region16: #{tpu_custom_call.1} parent=11 // pred_fallthru
          _
        // Predicated region
        $region17: #{tpu_custom_call.1} parent=11 // pred_check
          %p338 = pneg %p142
        $region18: #{tpu_custom_call.1} parent=11 // pred_check_branch
          %340 = sbr.rel (%p338) target = $region20
        $region19: #{tpu_custom_call.1} parent=11 // pred_region
          _
        $region20: #{tpu_custom_call.1} parent=11 // pred_fallthru
          _
        // Predicated region
        $region21: #{tpu_custom_call.1} parent=11 // pred_check
          %p341 = pneg %p163
        $region22: #{tpu_custom_call.1} parent=11 // pred_check_branch
          %343 = sbr.rel (%p341) target = $region24
        $region23: #{tpu_custom_call.1} parent=11 // pred_region
          _
        $region24: #{tpu_custom_call.1} parent=11 // pred_fallthru
          _
        // Predicated region
        $region25: #{tpu_custom_call.1} parent=11 // pred_check
          %p344 = pneg %p184
        $region26: #{tpu_custom_call.1} parent=11 // pred_check_branch
          %346 = sbr.rel (%p344) target = $region28
        $region27: #{tpu_custom_call.1} parent=11 // pred_region
          _
        $region28: #{tpu_custom_call.1} parent=11 // pred_fallthru
          _
        // Predicated region
        $region29: #{tpu_custom_call.1} parent=11 // pred_check
          %p347 = pneg %p205
        $region30: #{tpu_custom_call.1} parent=11 // pred_check_branch
          %349 = sbr.rel (%p347) target = $region32
        $region31: #{tpu_custom_call.1} parent=11 // pred_region
          _
        $region32: #{tpu_custom_call.1} parent=11 // pred_fallthru
          _
        // Predicated region
        $region33: #{tpu_custom_call.1} parent=11 // pred_check
          %p350 = pneg %p226
        $region34: #{tpu_custom_call.1} parent=11 // pred_check_branch
          %352 = sbr.rel (%p350) target = $region36
        $region35: #{tpu_custom_call.1} parent=11 // pred_region
          _
        $region36: #{tpu_custom_call.1} parent=11 // pred_fallthru
          _
        // Predicated region
        $region37: #{tpu_custom_call.1} parent=11 // pred_check
          %p353 = pneg %p247
        $region38: #{tpu_custom_call.1} parent=11 // pred_check_branch
          %355 = sbr.rel (%p353) target = $region40
        $region39: #{tpu_custom_call.1} parent=11 // pred_region
          _
        $region40: #{tpu_custom_call.1} parent=11 // pred_fallthru
          _
        // Predicated region
        $region41: #{tpu_custom_call.1} parent=11 // pred_check
          %p356 = pneg %p268
        $region42: #{tpu_custom_call.1} parent=11 // pred_check_branch
          %358 = sbr.rel (%p356) target = $region44
        $region43: #{tpu_custom_call.1} parent=11 // pred_region
          _
        $region44: #{tpu_custom_call.1} parent=11 // pred_fallthru
          _
      $region12: #{tpu_custom_call.1} parent=5 // pred_fallthru
        _
      %p359 = scmp.lt.s32.totalorder %s22, 4
      // Predicated region
      $region45: #{tpu_custom_call.1} parent=5 // pred_check
        %p360 = pneg %p359
      $region46: #{tpu_custom_call.1} parent=5 // pred_check_branch
        %362 = sbr.rel (%p360) target = $region48
      $region47: #{tpu_custom_call.1} parent=5 // pred_region
        // Predicated region
        $region49: #{tpu_custom_call.1} parent=47 // pred_check
          %p363 = pneg %p42
        $region50: #{tpu_custom_call.1} parent=47 // pred_check_branch
          %365 = sbr.rel (%p363) target = $region52
        $region51: #{tpu_custom_call.1} parent=47 // pred_region
          %s366 = smul.u32 8, %s22
          %p367 = scmp.lt.s32.totalorder %s366, 31
          %s368 = scalar_select %p367, %s366, 31
          %s369 = smul.addr %s368, 8
          %s370 = scalar_lea.vmem %s0, %s369
          %s371 = smul.u32 8, %s22
        $region52: #{tpu_custom_call.1} parent=47 // pred_fallthru
          _
        // Predicated region
        $region53: #{tpu_custom_call.1} parent=47 // pred_check
          %p372 = pneg %p68
        $region54: #{tpu_custom_call.1} parent=47 // pred_check_branch
          %374 = sbr.rel (%p372) target = $region56
        $region55: #{tpu_custom_call.1} parent=47 // pred_region
          %s375 = smul.u32 8, %s22
          %p376 = scmp.lt.s32.totalorder %s375, 31
          %s377 = scalar_select %p376, %s375, 31
          %s378 = smul.addr %s377, 8
          %s379 = scalar_lea.vmem %s1, %s378
          %s380 = smul.u32 8, %s22
        $region56: #{tpu_custom_call.1} parent=47 // pred_fallthru
          _
        // Predicated region
        $region57: #{tpu_custom_call.1} parent=47 // pred_check
          %p381 = pneg %p94
        $region58: #{tpu_custom_call.1} parent=47 // pred_check_branch
          %383 = sbr.rel (%p381) target = $region60
        $region59: #{tpu_custom_call.1} parent=47 // pred_region
          %s384 = smul.u32 8, %s22
          %p385 = scmp.lt.s32.totalorder %s384, 31
          %s386 = scalar_select %p385, %s384, 31
          %s387 = smul.addr %s386, 8
          %s388 = scalar_lea.vmem %s2, %s387
          %s389 = smul.u32 8, %s22
        $region60: #{tpu_custom_call.1} parent=47 // pred_fallthru
          _
      $region48: #{tpu_custom_call.1} parent=5 // pred_fallthru
        _
      %p390 = scmp.le.s32.totalorder 1, %s22
      %p391 = scmp.lt.s32.totalorder %s22, 5
      %p392 = pnand %p390, %p391
      %p393 = pneg %p392
      // Predicated region
      $region61: #{tpu_custom_call.1} parent=5 // pred_check
        _
      $region62: #{tpu_custom_call.1} parent=5 // pred_check_branch
        %395 = sbr.rel (%p392) target = $region64
      $region63: #{tpu_custom_call.1} parent=5 // pred_region
        %s396 = ssub.s32 %s22, 1
        %s397 = smul.u32 8, %s27
        %p398 = scmp.lt.s32.totalorder %s397, 31
        %s399 = scalar_select %p398, %s397, 31
        %s400 = smul.addr %s399, 8
        %s401 = scalar_lea.vmem %s0, %s400
        %p402 = pneg %p48
        %p403 = pneg %p45
        %s404 = smul.u32 8, %s27
        %p405 = scmp.lt.s32.totalorder %s404, 31
        %s406 = scalar_select %p405, %s404, 31
        %s407 = smul.addr %s406, 8
        %s408 = scalar_lea.vmem %s1, %s407
        %p409 = pneg %p74
        %p410 = pneg %p71
        %s411 = smul.u32 8, %s27
        %p412 = scmp.lt.s32.totalorder %s411, 31
        %s413 = scalar_select %p412, %s411, 31
        %s414 = smul.addr %s413, 8
        %s415 = scalar_lea.vmem %s2, %s414
        %p416 = pneg %p100
        %p417 = pneg %p97
        %p418 = pneg %p121
        %p419 = pneg %p118
        %p420 = pneg %p142
        %p421 = pneg %p139
        %p422 = pneg %p163
        %p423 = pneg %p160
        %p424 = pneg %p184
        %p425 = pneg %p181
        %p426 = pneg %p205
        %p427 = pneg %p202
        %p428 = pneg %p226
        %p429 = pneg %p223
        %p430 = pneg %p247
        %p431 = pneg %p244
        %p432 = pneg %p268
        %p433 = pneg %p265
        %p434 = pneg %p294
        %p435 = pneg %p291
        %s436 = sand.u32 %s281, 1
        %s437 = scalar_lea.sflag [#allocation3], %s436
        %s438 = sand.u32 %s281, 1
        %s439 = smul.addr %s438, 64
        %s440 = scalar_lea.vmem [#allocation2], %s439
        %p441 = pneg %p320
        %p442 = pneg %p317
        %s443 = smul.u32 8, %s27
        %p444 = scmp.lt.s32.totalorder %s443, 31
        %s445 = scalar_select %p444, %s443, 31
        %s446 = smul.addr %s445, 8
        %s447 = scalar_lea.vmem %s12, %s446
        %s448 = smul.u32 8, %s27
        %p449 = scmp.lt.s32.totalorder %s448, 31
        %s450 = scalar_select %p449, %s448, 31
        %s451 = smul.addr %s450, 8
        %s452 = scalar_lea.vmem %s0, %s451
        %s453 = smul.u32 8, %s27
        %s454 = smul.u32 8, %s27
        %p455 = scmp.lt.s32.totalorder %s454, 31
        %s456 = scalar_select %p455, %s454, 31
        %s457 = smul.addr %s456, 8
        %s458 = scalar_lea.vmem %s1, %s457
        %s459 = smul.u32 8, %s27
        %s460 = smul.u32 8, %s27
        %p461 = scmp.lt.s32.totalorder %s460, 31
        %s462 = scalar_select %p461, %s460, 31
        %s463 = smul.addr %s462, 8
        %s464 = scalar_lea.vmem %s2, %s463
        %s465 = smul.u32 8, %s27
        %s466 = smul.u32 8, %s27
        %s467 = smul.u32 8, %s27
        %p468 = scmp.lt.s32.totalorder %s467, 31
        %s469 = scalar_select %p468, %s467, 31
        %s470 = smul.addr %s469, 8
        %s471 = scalar_lea.vmem %s12, %s470
        %s472 = smul.u32 8, %s27
        %v473 = vld [vmem:[%s452] sm:$0xff]
        %v474 = vld [vmem:[%s452 + $0x8] sm:$0xff]
        %v475 = vld [vmem:[%s452 + $0x10] sm:$0xff]
        %v476 = vld [vmem:[%s452 + $0x18] sm:$0xff]
        %v477 = vld [vmem:[%s452 + $0x20] sm:$0xff]
        %v478 = vld [vmem:[%s452 + $0x28] sm:$0xff]
        %v479 = vld [vmem:[%s452 + $0x30] sm:$0xff]
        %v480 = vld [vmem:[%s452 + $0x38] sm:$0xff]
        %v481 = vld [vmem:[%s458] sm:$0xff]
        %v482 = vld [vmem:[%s458 + $0x8] sm:$0xff]
        %v483 = vld [vmem:[%s458 + $0x10] sm:$0xff]
        %v484 = vld [vmem:[%s458 + $0x18] sm:$0xff]
        %v485 = vld [vmem:[%s458 + $0x20] sm:$0xff]
        %v486 = vld [vmem:[%s458 + $0x28] sm:$0xff]
        %v487 = vld [vmem:[%s458 + $0x30] sm:$0xff]
        %v488 = vld [vmem:[%s458 + $0x38] sm:$0xff]
        %v489 = vld [vmem:[%s464] sm:$0xff]
        %v490 = vld [vmem:[%s464 + $0x8] sm:$0xff]
        %v491 = vld [vmem:[%s464 + $0x10] sm:$0xff]
        %v492 = vld [vmem:[%s464 + $0x18] sm:$0xff]
        %v493 = vld [vmem:[%s464 + $0x20] sm:$0xff]
        %v494 = vld [vmem:[%s464 + $0x28] sm:$0xff]
        %v495 = vld [vmem:[%s464 + $0x30] sm:$0xff]
        %v496 = vld [vmem:[%s464 + $0x38] sm:$0xff]
        %v497 = vld [vmem:[%s3] sm:$0xff]
        %v498 = vld [vmem:[%s3 + $0x8] sm:$0xff]
        %v499 = vld [vmem:[%s3 + $0x10] sm:$0xff]
        %v500 = vld [vmem:[%s3 + $0x18] sm:$0xff]
        %v501 = vld [vmem:[%s3 + $0x20] sm:$0xff]
        %v502 = vld [vmem:[%s3 + $0x28] sm:$0xff]
        %v503 = vld [vmem:[%s3 + $0x30] sm:$0xff]
        %v504 = vld [vmem:[%s3 + $0x38] sm:$0xff]
        %v505 = vld [vmem:[%s3 + $0x40] sm:$0xff]
        %v506 = vld [vmem:[%s3 + $0x48] sm:$0xff]
        %v507 = vld [vmem:[%s3 + $0x50] sm:$0xff]
        %v508 = vld [vmem:[%s3 + $0x58] sm:$0xff]
        %v509 = vld [vmem:[%s3 + $0x60] sm:$0xff]
        %v510 = vld [vmem:[%s3 + $0x68] sm:$0xff]
        %v511 = vld [vmem:[%s3 + $0x70] sm:$0xff]
        %v512 = vld [vmem:[%s3 + $0x78] sm:$0xff]
        %v513 = vld [vmem:[%s4] sm:$0xff]
        %v514 = vld [vmem:[%s4 + $0x8] sm:$0xff]
        %v515 = vld [vmem:[%s4 + $0x10] sm:$0xff]
        %v516 = vld [vmem:[%s4 + $0x18] sm:$0xff]
        %v517 = vld [vmem:[%s4 + $0x20] sm:$0xff]
        %v518 = vld [vmem:[%s4 + $0x28] sm:$0xff]
        %v519 = vld [vmem:[%s4 + $0x30] sm:$0xff]
        %v520 = vld [vmem:[%s4 + $0x38] sm:$0xff]
        %v521 = vld [vmem:[%s4 + $0x40] sm:$0xff]
        %v522 = vld [vmem:[%s4 + $0x48] sm:$0xff]
        %v523 = vld [vmem:[%s4 + $0x50] sm:$0xff]
        %v524 = vld [vmem:[%s4 + $0x58] sm:$0xff]
        %v525 = vld [vmem:[%s4 + $0x60] sm:$0xff]
        %v526 = vld [vmem:[%s4 + $0x68] sm:$0xff]
        %v527 = vld [vmem:[%s4 + $0x70] sm:$0xff]
        %v528 = vld [vmem:[%s4 + $0x78] sm:$0xff]
        %vm529 = vcmask 523264
        %v531 = vsel %vm529, %v481, 0
        %v534 = vsel %vm529, %v482, 0
        %v537 = vsel %vm529, %v483, 0
        %v540 = vsel %vm529, %v484, 0
        %v543 = vsel %vm529, %v485, 0
        %v546 = vsel %vm529, %v486, 0
        %v549 = vsel %vm529, %v487, 0
        %v552 = vsel %vm529, %v488, 0
        %554 = vmatpush.msra.mxu0 0.0
        %555 = vmatpush.msra.mxu0 0.0
        %556 = vmatpush.msra.mxu0 0.0
        %557 = vmatpush.msra.mxu0 0.0
        %558 = vmatpush.msra.mxu0 0.0
        %559 = vmatpush.msra.mxu0 0.0
        %560 = vmatpush.msra.mxu0 0.0
        %561 = vmatpush.msra.mxu0 0.0
        %562 = vmatpush.msra.mxu0 %v527
        %563 = vmatpush.msra.mxu0 %v525
        %564 = vmatpush.msra.mxu0 %v523
        %565 = vmatpush.msra.mxu0 %v521
        %566 = vmatpush.msra.mxu0 %v519
        %567 = vmatpush.msra.mxu0 %v517
        %568 = vmatpush.msra.mxu0 %v515
        %569 = vmatpush.msra.mxu0 %v513
        %570 = vmatmul.f32.gmra.mxu0 %v531
        %v571 = vpop.f32.mrf.mxu0
        %v572 = vadd.f32 0.0, %v571
        %573 = vmatmul.f32.gmra.mxu0 %v534
        %v574 = vpop.f32.mrf.mxu0
        %v575 = vadd.f32 0.0, %v574
        %576 = vmatmul.f32.gmra.mxu0 %v537
        %v577 = vpop.f32.mrf.mxu0
        %v578 = vadd.f32 0.0, %v577
        %579 = vmatmul.f32.gmra.mxu0 %v540
        %v580 = vpop.f32.mrf.mxu0
        %v581 = vadd.f32 0.0, %v580
        %582 = vmatmul.f32.gmra.mxu0 %v543
        %v583 = vpop.f32.mrf.mxu0
        %v584 = vadd.f32 0.0, %v583
        %585 = vmatmul.f32.gmra.mxu0 %v546
        %v586 = vpop.f32.mrf.mxu0
        %v587 = vadd.f32 0.0, %v586
        %588 = vmatmul.f32.gmra.mxu0 %v549
        %v589 = vpop.f32.mrf.mxu0
        %v590 = vadd.f32 0.0, %v589
        %591 = vmatmul.f32.gmra.mxu0 %v552
        %v592 = vpop.f32.mrf.mxu0
        %v593 = vadd.f32 0.0, %v592
        %594 = vdwg.mxu0
        %595 = vmatpush.msra.mxu0 0.0
        %596 = vmatpush.msra.mxu0 0.0
        %597 = vmatpush.msra.mxu0 0.0
        %598 = vmatpush.msra.mxu0 0.0
        %599 = vmatpush.msra.mxu0 0.0
        %600 = vmatpush.msra.mxu0 0.0
        %601 = vmatpush.msra.mxu0 0.0
        %602 = vmatpush.msra.mxu0 0.0
        %603 = vmatpush.msra.mxu0 %v528
        %604 = vmatpush.msra.mxu0 %v526
        %605 = vmatpush.msra.mxu0 %v524
        %606 = vmatpush.msra.mxu0 %v522
        %607 = vmatpush.msra.mxu0 %v520
        %608 = vmatpush.msra.mxu0 %v518
        %609 = vmatpush.msra.mxu0 %v516
        %610 = vmatpush.msra.mxu0 %v514
        %611 = vmatmul.f32.gmra.mxu0 %v531
        %v612 = vpop.f32.mrf.mxu0
        %v613 = vadd.f32 0.0, %v612
        %614 = vmatmul.f32.gmra.mxu0 %v534
        %v615 = vpop.f32.mrf.mxu0
        %v616 = vadd.f32 0.0, %v615
        %617 = vmatmul.f32.gmra.mxu0 %v537
        %v618 = vpop.f32.mrf.mxu0
        %v619 = vadd.f32 0.0, %v618
        %620 = vmatmul.f32.gmra.mxu0 %v540
        %v621 = vpop.f32.mrf.mxu0
        %v622 = vadd.f32 0.0, %v621
        %623 = vmatmul.f32.gmra.mxu0 %v543
        %v624 = vpop.f32.mrf.mxu0
        %v625 = vadd.f32 0.0, %v624
        %626 = vmatmul.f32.gmra.mxu0 %v546
        %v627 = vpop.f32.mrf.mxu0
        %v628 = vadd.f32 0.0, %v627
        %629 = vmatmul.f32.gmra.mxu0 %v549
        %v630 = vpop.f32.mrf.mxu0
        %v631 = vadd.f32 0.0, %v630
        %632 = vmatmul.f32.gmra.mxu0 %v552
        %v633 = vpop.f32.mrf.mxu0
        %v634 = vadd.f32 0.0, %v633
        %635 = vdwg.mxu0
        %v637 = vsel %vm529, %v473, 0
        %v640 = vsel %vm529, %v474, 0
        %v643 = vsel %vm529, %v475, 0
        %v646 = vsel %vm529, %v476, 0
        %v649 = vsel %vm529, %v477, 0
        %v652 = vsel %vm529, %v478, 0
        %v655 = vsel %vm529, %v479, 0
        %v658 = vsel %vm529, %v480, 0
        %660 = vmatpush.msra.mxu0 0.0
        %661 = vmatpush.msra.mxu0 0.0
        %662 = vmatpush.msra.mxu0 0.0
        %663 = vmatpush.msra.mxu0 0.0
        %664 = vmatpush.msra.mxu0 0.0
        %665 = vmatpush.msra.mxu0 0.0
        %666 = vmatpush.msra.mxu0 0.0
        %667 = vmatpush.msra.mxu0 0.0
        %668 = vmatpush.msra.mxu0 %v511
        %669 = vmatpush.msra.mxu0 %v509
        %670 = vmatpush.msra.mxu0 %v507
        %671 = vmatpush.msra.mxu0 %v505
        %672 = vmatpush.msra.mxu0 %v503
        %673 = vmatpush.msra.mxu0 %v501
        %674 = vmatpush.msra.mxu0 %v499
        %675 = vmatpush.msra.mxu0 %v497
        %676 = vmatmul.f32.gmra.mxu0 %v637
        %v677 = vpop.f32.mrf.mxu0
        %v678 = vadd.f32 %v572, %v677
        %679 = vmatmul.f32.gmra.mxu0 %v640
        %v680 = vpop.f32.mrf.mxu0
        %v681 = vadd.f32 %v575, %v680
        %682 = vmatmul.f32.gmra.mxu0 %v643
        %v683 = vpop.f32.mrf.mxu0
        %v684 = vadd.f32 %v578, %v683
        %685 = vmatmul.f32.gmra.mxu0 %v646
        %v686 = vpop.f32.mrf.mxu0
        %v687 = vadd.f32 %v581, %v686
        %688 = vmatmul.f32.gmra.mxu0 %v649
        %v689 = vpop.f32.mrf.mxu0
        %v690 = vadd.f32 %v584, %v689
        %691 = vmatmul.f32.gmra.mxu0 %v652
        %v692 = vpop.f32.mrf.mxu0
        %v693 = vadd.f32 %v587, %v692
        %694 = vmatmul.f32.gmra.mxu0 %v655
        %v695 = vpop.f32.mrf.mxu0
        %v696 = vadd.f32 %v590, %v695
        %697 = vmatmul.f32.gmra.mxu0 %v658
        %v698 = vpop.f32.mrf.mxu0
        %v699 = vadd.f32 %v593, %v698
        %700 = vdwg.mxu0
        %701 = vmatpush.msra.mxu0 0.0
        %702 = vmatpush.msra.mxu0 0.0
        %703 = vmatpush.msra.mxu0 0.0
        %704 = vmatpush.msra.mxu0 0.0
        %705 = vmatpush.msra.mxu0 0.0
        %706 = vmatpush.msra.mxu0 0.0
        %707 = vmatpush.msra.mxu0 0.0
        %708 = vmatpush.msra.mxu0 0.0
        %709 = vmatpush.msra.mxu0 %v512
        %710 = vmatpush.msra.mxu0 %v510
        %711 = vmatpush.msra.mxu0 %v508
        %712 = vmatpush.msra.mxu0 %v506
        %713 = vmatpush.msra.mxu0 %v504
        %714 = vmatpush.msra.mxu0 %v502
        %715 = vmatpush.msra.mxu0 %v500
        %716 = vmatpush.msra.mxu0 %v498
        %717 = vmatmul.f32.gmra.mxu0 %v637
        %v718 = vpop.f32.mrf.mxu0
        %v719 = vadd.f32 %v613, %v718
        %720 = vmatmul.f32.gmra.mxu0 %v640
        %v721 = vpop.f32.mrf.mxu0
        %v722 = vadd.f32 %v616, %v721
        %723 = vmatmul.f32.gmra.mxu0 %v643
        %v724 = vpop.f32.mrf.mxu0
        %v725 = vadd.f32 %v619, %v724
        %726 = vmatmul.f32.gmra.mxu0 %v646
        %v727 = vpop.f32.mrf.mxu0
        %v728 = vadd.f32 %v622, %v727
        %729 = vmatmul.f32.gmra.mxu0 %v649
        %v730 = vpop.f32.mrf.mxu0
        %v731 = vadd.f32 %v625, %v730
        %732 = vmatmul.f32.gmra.mxu0 %v652
        %v733 = vpop.f32.mrf.mxu0
        %v734 = vadd.f32 %v628, %v733
        %735 = vmatmul.f32.gmra.mxu0 %v655
        %v736 = vpop.f32.mrf.mxu0
        %v737 = vadd.f32 %v631, %v736
        %738 = vmatmul.f32.gmra.mxu0 %v658
        %v739 = vpop.f32.mrf.mxu0
        %v740 = vadd.f32 %v634, %v739
        %741 = vdwg.mxu0
        %v742 = vld [vmem:[%s5] sm:$0xff]
        %v743 = vld [vmem:[%s5 + $0x8] sm:$0xff]
        %v744 = vld [vmem:[%s5 + $0x10] sm:$0xff]
        %v745 = vld [vmem:[%s5 + $0x18] sm:$0xff]
        %v746 = vld [vmem:[%s5 + $0x20] sm:$0xff]
        %v747 = vld [vmem:[%s5 + $0x28] sm:$0xff]
        %v748 = vld [vmem:[%s5 + $0x30] sm:$0xff]
        %v749 = vld [vmem:[%s5 + $0x38] sm:$0xff]
        %v750 = vld [vmem:[%s5 + $0x40] sm:$0xff]
        %v751 = vld [vmem:[%s5 + $0x48] sm:$0xff]
        %v752 = vld [vmem:[%s5 + $0x50] sm:$0xff]
        %v753 = vld [vmem:[%s5 + $0x58] sm:$0xff]
        %v754 = vld [vmem:[%s5 + $0x60] sm:$0xff]
        %v755 = vld [vmem:[%s5 + $0x68] sm:$0xff]
        %v756 = vld [vmem:[%s5 + $0x70] sm:$0xff]
        %v757 = vld [vmem:[%s5 + $0x78] sm:$0xff]
        %v759 = vsel %vm529, %v489, 0
        %v762 = vsel %vm529, %v490, 0
        %v765 = vsel %vm529, %v491, 0
        %v768 = vsel %vm529, %v492, 0
        %v771 = vsel %vm529, %v493, 0
        %v774 = vsel %vm529, %v494, 0
        %v777 = vsel %vm529, %v495, 0
        %v780 = vsel %vm529, %v496, 0
        %782 = vmatpush.msra.mxu0 0.0
        %783 = vmatpush.msra.mxu0 0.0
        %784 = vmatpush.msra.mxu0 0.0
        %785 = vmatpush.msra.mxu0 0.0
        %786 = vmatpush.msra.mxu0 0.0
        %787 = vmatpush.msra.mxu0 0.0
        %788 = vmatpush.msra.mxu0 0.0
        %789 = vmatpush.msra.mxu0 0.0
        %790 = vmatpush.msra.mxu0 %v756
        %791 = vmatpush.msra.mxu0 %v754
        %792 = vmatpush.msra.mxu0 %v752
        %793 = vmatpush.msra.mxu0 %v750
        %794 = vmatpush.msra.mxu0 %v748
        %795 = vmatpush.msra.mxu0 %v746
        %796 = vmatpush.msra.mxu0 %v744
        %797 = vmatpush.msra.mxu0 %v742
        %798 = vmatmul.f32.gmra.mxu0 %v759
        %v799 = vpop.f32.mrf.mxu0
        %v800 = vadd.f32 0.0, %v799
        %801 = vmatmul.f32.gmra.mxu0 %v762
        %v802 = vpop.f32.mrf.mxu0
        %v803 = vadd.f32 0.0, %v802
        %804 = vmatmul.f32.gmra.mxu0 %v765
        %v805 = vpop.f32.mrf.mxu0
        %v806 = vadd.f32 0.0, %v805
        %807 = vmatmul.f32.gmra.mxu0 %v768
        %v808 = vpop.f32.mrf.mxu0
        %v809 = vadd.f32 0.0, %v808
        %810 = vmatmul.f32.gmra.mxu0 %v771
        %v811 = vpop.f32.mrf.mxu0
        %v812 = vadd.f32 0.0, %v811
        %813 = vmatmul.f32.gmra.mxu0 %v774
        %v814 = vpop.f32.mrf.mxu0
        %v815 = vadd.f32 0.0, %v814
        %816 = vmatmul.f32.gmra.mxu0 %v777
        %v817 = vpop.f32.mrf.mxu0
        %v818 = vadd.f32 0.0, %v817
        %819 = vmatmul.f32.gmra.mxu0 %v780
        %v820 = vpop.f32.mrf.mxu0
        %v821 = vadd.f32 0.0, %v820
        %822 = vdwg.mxu0
        %823 = vmatpush.msra.mxu0 0.0
        %824 = vmatpush.msra.mxu0 0.0
        %825 = vmatpush.msra.mxu0 0.0
        %826 = vmatpush.msra.mxu0 0.0
        %827 = vmatpush.msra.mxu0 0.0
        %828 = vmatpush.msra.mxu0 0.0
        %829 = vmatpush.msra.mxu0 0.0
        %830 = vmatpush.msra.mxu0 0.0
        %831 = vmatpush.msra.mxu0 %v757
        %832 = vmatpush.msra.mxu0 %v755
        %833 = vmatpush.msra.mxu0 %v753
        %834 = vmatpush.msra.mxu0 %v751
        %835 = vmatpush.msra.mxu0 %v749
        %836 = vmatpush.msra.mxu0 %v747
        %837 = vmatpush.msra.mxu0 %v745
        %838 = vmatpush.msra.mxu0 %v743
        %839 = vmatmul.f32.gmra.mxu0 %v759
        %v840 = vpop.f32.mrf.mxu0
        %v841 = vadd.f32 0.0, %v840
        %842 = vmatmul.f32.gmra.mxu0 %v762
        %v843 = vpop.f32.mrf.mxu0
        %v844 = vadd.f32 0.0, %v843
        %845 = vmatmul.f32.gmra.mxu0 %v765
        %v846 = vpop.f32.mrf.mxu0
        %v847 = vadd.f32 0.0, %v846
        %848 = vmatmul.f32.gmra.mxu0 %v768
        %v849 = vpop.f32.mrf.mxu0
        %v850 = vadd.f32 0.0, %v849
        %851 = vmatmul.f32.gmra.mxu0 %v771
        %v852 = vpop.f32.mrf.mxu0
        %v853 = vadd.f32 0.0, %v852
        %854 = vmatmul.f32.gmra.mxu0 %v774
        %v855 = vpop.f32.mrf.mxu0
        %v856 = vadd.f32 0.0, %v855
        %857 = vmatmul.f32.gmra.mxu0 %v777
        %v858 = vpop.f32.mrf.mxu0
        %v859 = vadd.f32 0.0, %v858
        %860 = vmatmul.f32.gmra.mxu0 %v780
        %v861 = vpop.f32.mrf.mxu0
        %v862 = vadd.f32 0.0, %v861
        %863 = vdwg.mxu0
        %v864 = vadd.f32 %v678, %v800
        %v865 = vadd.f32 %v719, %v841
        %v866 = vadd.f32 %v681, %v803
        %v867 = vadd.f32 %v722, %v844
        %v868 = vadd.f32 %v684, %v806
        %v869 = vadd.f32 %v725, %v847
        %v870 = vadd.f32 %v687, %v809
        %v871 = vadd.f32 %v728, %v850
        %v872 = vadd.f32 %v690, %v812
        %v873 = vadd.f32 %v731, %v853
        %v874 = vadd.f32 %v693, %v815
        %v875 = vadd.f32 %v734, %v856
        %v876 = vadd.f32 %v696, %v818
        %v877 = vadd.f32 %v737, %v859
        %v878 = vadd.f32 %v699, %v821
        %v879 = vadd.f32 %v740, %v862
        %v880 = vmul.f32 %v473, %v473
        %v881 = vmul.f32 %v474, %v474
        %v882 = vmul.f32 %v475, %v475
        %v883 = vmul.f32 %v476, %v476
        %v884 = vmul.f32 %v477, %v477
        %v885 = vmul.f32 %v478, %v478
        %v886 = vmul.f32 %v479, %v479
        %v887 = vmul.f32 %v480, %v480
        %v888 = vmul.f32 %v489, %v489
        %v889 = vmul.f32 %v490, %v490
        %v890 = vmul.f32 %v491, %v491
        %v891 = vmul.f32 %v492, %v492
        %v892 = vmul.f32 %v493, %v493
        %v893 = vmul.f32 %v494, %v494
        %v894 = vmul.f32 %v495, %v495
        %v895 = vmul.f32 %v496, %v496
        %v896 = vadd.f32 %v880, %v888
        %v897 = vadd.f32 %v881, %v889
        %v898 = vadd.f32 %v882, %v890
        %v899 = vadd.f32 %v883, %v891
        %v900 = vadd.f32 %v884, %v892
        %v901 = vadd.f32 %v885, %v893
        %v902 = vadd.f32 %v886, %v894
        %v903 = vadd.f32 %v887, %v895
        %v904 = vld [vmem:[%s6] sm:$0xff]
        %v905 = vld [vmem:[%s6 + $0x8] sm:$0xff]
        %v906 = vld [vmem:[%s6 + $0x10] sm:$0xff]
        %v907 = vld [vmem:[%s6 + $0x18] sm:$0xff]
        %v908 = vld [vmem:[%s6 + $0x20] sm:$0xff]
        %v909 = vld [vmem:[%s6 + $0x28] sm:$0xff]
        %v910 = vld [vmem:[%s6 + $0x30] sm:$0xff]
        %v911 = vld [vmem:[%s6 + $0x38] sm:$0xff]
        %v912 = vmul.f32 %v481, %v481
        %v913 = vmul.f32 %v482, %v482
        %v914 = vmul.f32 %v483, %v483
        %v915 = vmul.f32 %v484, %v484
        %v916 = vmul.f32 %v485, %v485
        %v917 = vmul.f32 %v486, %v486
        %v918 = vmul.f32 %v487, %v487
        %v919 = vmul.f32 %v488, %v488
        %v920 = vld [vmem:[%s7] sm:$0xff]
        %v921 = vld [vmem:[%s7 + $0x8] sm:$0xff]
        %v922 = vld [vmem:[%s7 + $0x10] sm:$0xff]
        %v923 = vld [vmem:[%s7 + $0x18] sm:$0xff]
        %v924 = vld [vmem:[%s7 + $0x20] sm:$0xff]
        %v925 = vld [vmem:[%s7 + $0x28] sm:$0xff]
        %v926 = vld [vmem:[%s7 + $0x30] sm:$0xff]
        %v927 = vld [vmem:[%s7 + $0x38] sm:$0xff]
        %v929 = vsel %vm529, %v912, 0
        %v932 = vsel %vm529, %v913, 0
        %v935 = vsel %vm529, %v914, 0
        %v938 = vsel %vm529, %v915, 0
        %v941 = vsel %vm529, %v916, 0
        %v944 = vsel %vm529, %v917, 0
        %v947 = vsel %vm529, %v918, 0
        %v950 = vsel %vm529, %v919, 0
        %952 = vmatpush.msra.mxu0 0.0
        %953 = vmatpush.msra.mxu0 0.0
        %954 = vmatpush.msra.mxu0 0.0
        %955 = vmatpush.msra.mxu0 0.0
        %956 = vmatpush.msra.mxu0 0.0
        %957 = vmatpush.msra.mxu0 0.0
        %958 = vmatpush.msra.mxu0 0.0
        %959 = vmatpush.msra.mxu0 0.0
        %960 = vmatpush.msra.mxu0 %v927
        %961 = vmatpush.msra.mxu0 %v926
        %962 = vmatpush.msra.mxu0 %v925
        %963 = vmatpush.msra.mxu0 %v924
        %964 = vmatpush.msra.mxu0 %v923
        %965 = vmatpush.msra.mxu0 %v922
        %966 = vmatpush.msra.mxu0 %v921
        %967 = vmatpush.msra.mxu0 %v920
        %968 = vmatmul.f32.gmra.mxu0 %v929
        %v969 = vpop.f32.mrf.mxu0
        %v970 = vadd.f32 0.0, %v969
        %971 = vmatmul.f32.gmra.mxu0 %v932
        %v972 = vpop.f32.mrf.mxu0
        %v973 = vadd.f32 0.0, %v972
        %974 = vmatmul.f32.gmra.mxu0 %v935
        %v975 = vpop.f32.mrf.mxu0
        %v976 = vadd.f32 0.0, %v975
        %977 = vmatmul.f32.gmra.mxu0 %v938
        %v978 = vpop.f32.mrf.mxu0
        %v979 = vadd.f32 0.0, %v978
        %980 = vmatmul.f32.gmra.mxu0 %v941
        %v981 = vpop.f32.mrf.mxu0
        %v982 = vadd.f32 0.0, %v981
        %983 = vmatmul.f32.gmra.mxu0 %v944
        %v984 = vpop.f32.mrf.mxu0
        %v985 = vadd.f32 0.0, %v984
        %986 = vmatmul.f32.gmra.mxu0 %v947
        %v987 = vpop.f32.mrf.mxu0
        %v988 = vadd.f32 0.0, %v987
        %989 = vmatmul.f32.gmra.mxu0 %v950
        %v990 = vpop.f32.mrf.mxu0
        %v991 = vadd.f32 0.0, %v990
        %992 = vdwg.mxu0
        %v994 = vsel %vm529, %v896, 0
        %v997 = vsel %vm529, %v897, 0
        %v1000 = vsel %vm529, %v898, 0
        %v1003 = vsel %vm529, %v899, 0
        %v1006 = vsel %vm529, %v900, 0
        %v1009 = vsel %vm529, %v901, 0
        %v1012 = vsel %vm529, %v902, 0
        %v1015 = vsel %vm529, %v903, 0
        %1017 = vmatpush.msra.mxu0 0.0
        %1018 = vmatpush.msra.mxu0 0.0
        %1019 = vmatpush.msra.mxu0 0.0
        %1020 = vmatpush.msra.mxu0 0.0
        %1021 = vmatpush.msra.mxu0 0.0
        %1022 = vmatpush.msra.mxu0 0.0
        %1023 = vmatpush.msra.mxu0 0.0
        %1024 = vmatpush.msra.mxu0 0.0
        %1025 = vmatpush.msra.mxu0 %v911
        %1026 = vmatpush.msra.mxu0 %v910
        %1027 = vmatpush.msra.mxu0 %v909
        %1028 = vmatpush.msra.mxu0 %v908
        %1029 = vmatpush.msra.mxu0 %v907
        %1030 = vmatpush.msra.mxu0 %v906
        %1031 = vmatpush.msra.mxu0 %v905
        %1032 = vmatpush.msra.mxu0 %v904
        %1033 = vmatmul.f32.gmra.mxu0 %v994
        %v1034 = vpop.f32.mrf.mxu0
        %v1035 = vadd.f32 %v970, %v1034
        %1036 = vmatmul.f32.gmra.mxu0 %v997
        %v1037 = vpop.f32.mrf.mxu0
        %v1038 = vadd.f32 %v973, %v1037
        %1039 = vmatmul.f32.gmra.mxu0 %v1000
        %v1040 = vpop.f32.mrf.mxu0
        %v1041 = vadd.f32 %v976, %v1040
        %1042 = vmatmul.f32.gmra.mxu0 %v1003
        %v1043 = vpop.f32.mrf.mxu0
        %v1044 = vadd.f32 %v979, %v1043
        %1045 = vmatmul.f32.gmra.mxu0 %v1006
        %v1046 = vpop.f32.mrf.mxu0
        %v1047 = vadd.f32 %v982, %v1046
        %1048 = vmatmul.f32.gmra.mxu0 %v1009
        %v1049 = vpop.f32.mrf.mxu0
        %v1050 = vadd.f32 %v985, %v1049
        %1051 = vmatmul.f32.gmra.mxu0 %v1012
        %v1052 = vpop.f32.mrf.mxu0
        %v1053 = vadd.f32 %v988, %v1052
        %1054 = vmatmul.f32.gmra.mxu0 %v1015
        %v1055 = vpop.f32.mrf.mxu0
        %v1056 = vadd.f32 %v991, %v1055
        %1057 = vdwg.mxu0
        %v1058 = vmul.f32 %v865, 0.020833334
        %v1059 = vmul.f32 %v867, 0.020833334
        %v1060 = vmul.f32 %v869, 0.020833334
        %v1061 = vmul.f32 %v871, 0.020833334
        %v1062 = vmul.f32 %v873, 0.020833334
        %v1063 = vmul.f32 %v875, 0.020833334
        %v1064 = vmul.f32 %v877, 0.020833334
        %v1065 = vmul.f32 %v879, 0.020833334
        %v1066 = vmul.f32 %v1035, 0.020833334
        %v1067 = vmul.f32 %v1038, 0.020833334
        %v1068 = vmul.f32 %v1041, 0.020833334
        %v1069 = vmul.f32 %v1044, 0.020833334
        %v1070 = vmul.f32 %v1047, 0.020833334
        %v1071 = vmul.f32 %v1050, 0.020833334
        %v1072 = vmul.f32 %v1053, 0.020833334
        %v1073 = vmul.f32 %v1056, 0.020833334
        %v1074 = vmul.f32 %v1058, %v1058
        %v1075 = vmul.f32 %v1059, %v1059
        %v1076 = vmul.f32 %v1060, %v1060
        %v1077 = vmul.f32 %v1061, %v1061
        %v1078 = vmul.f32 %v1062, %v1062
        %v1079 = vmul.f32 %v1063, %v1063
        %v1080 = vmul.f32 %v1064, %v1064
        %v1081 = vmul.f32 %v1065, %v1065
        %v1082 = vsub.f32 %v1066, %v1074
        %v1083 = vsub.f32 %v1067, %v1075
        %v1084 = vsub.f32 %v1068, %v1076
        %v1085 = vsub.f32 %v1069, %v1077
        %v1086 = vsub.f32 %v1070, %v1078
        %v1087 = vsub.f32 %v1071, %v1079
        %v1088 = vsub.f32 %v1072, %v1080
        %v1089 = vsub.f32 %v1073, %v1081
        %v1090 = vmax.f32 %v1082, 0.0
        %v1091 = vmax.f32 %v1083, 0.0
        %v1092 = vmax.f32 %v1084, 0.0
        %v1093 = vmax.f32 %v1085, 0.0
        %v1094 = vmax.f32 %v1086, 0.0
        %v1095 = vmax.f32 %v1087, 0.0
        %v1096 = vmax.f32 %v1088, 0.0
        %v1097 = vmax.f32 %v1089, 0.0
        %v1098 = vadd.f32 %v1090, 1e-05
        %v1099 = vadd.f32 %v1091, 1e-05
        %v1100 = vadd.f32 %v1092, 1e-05
        %v1101 = vadd.f32 %v1093, 1e-05
        %v1102 = vadd.f32 %v1094, 1e-05
        %v1103 = vadd.f32 %v1095, 1e-05
        %v1104 = vadd.f32 %v1096, 1e-05
        %v1105 = vadd.f32 %v1097, 1e-05
        %v1106 = vrsqrt.pop %v1098
        %v1107 = vmul.f32 %v1106, %v1098
        %v1108 = vmul.f32 %v1107, %v1106
        %v1109 = vmul.f32 0.5, %v1108
        %v1110 = vsub.f32 1.5, %v1109
        %v1111 = vmul.f32 %v1106, %v1110
        %vm1112 = vweird.f32 %v1098
        %vm1113 = vweird.f32 %v1106
        %vm1114 = vmor %vm1112, %vm1113
        %v1115 = vsel %vm1114, %v1106, %v1111
        %v1116 = vrsqrt.pop %v1099
        %v1117 = vmul.f32 %v1116, %v1099
        %v1118 = vmul.f32 %v1117, %v1116
        %v1119 = vmul.f32 0.5, %v1118
        %v1120 = vsub.f32 1.5, %v1119
        %v1121 = vmul.f32 %v1116, %v1120
        %vm1122 = vweird.f32 %v1099
        %vm1123 = vweird.f32 %v1116
        %vm1124 = vmor %vm1122, %vm1123
        %v1125 = vsel %vm1124, %v1116, %v1121
        %v1126 = vrsqrt.pop %v1100
        %v1127 = vmul.f32 %v1126, %v1100
        %v1128 = vmul.f32 %v1127, %v1126
        %v1129 = vmul.f32 0.5, %v1128
        %v1130 = vsub.f32 1.5, %v1129
        %v1131 = vmul.f32 %v1126, %v1130
        %vm1132 = vweird.f32 %v1100
        %vm1133 = vweird.f32 %v1126
        %vm1134 = vmor %vm1132, %vm1133
        %v1135 = vsel %vm1134, %v1126, %v1131
        %v1136 = vrsqrt.pop %v1101
        %v1137 = vmul.f32 %v1136, %v1101
        %v1138 = vmul.f32 %v1137, %v1136
        %v1139 = vmul.f32 0.5, %v1138
        %v1140 = vsub.f32 1.5, %v1139
        %v1141 = vmul.f32 %v1136, %v1140
        %vm1142 = vweird.f32 %v1101
        %vm1143 = vweird.f32 %v1136
        %vm1144 = vmor %vm1142, %vm1143
        %v1145 = vsel %vm1144, %v1136, %v1141
        %v1146 = vrsqrt.pop %v1102
        %v1147 = vmul.f32 %v1146, %v1102
        %v1148 = vmul.f32 %v1147, %v1146
        %v1149 = vmul.f32 0.5, %v1148
        %v1150 = vsub.f32 1.5, %v1149
        %v1151 = vmul.f32 %v1146, %v1150
        %vm1152 = vweird.f32 %v1102
        %vm1153 = vweird.f32 %v1146
        %vm1154 = vmor %vm1152, %vm1153
        %v1155 = vsel %vm1154, %v1146, %v1151
        %v1156 = vrsqrt.pop %v1103
        %v1157 = vmul.f32 %v1156, %v1103
        %v1158 = vmul.f32 %v1157, %v1156
        %v1159 = vmul.f32 0.5, %v1158
        %v1160 = vsub.f32 1.5, %v1159
        %v1161 = vmul.f32 %v1156, %v1160
        %vm1162 = vweird.f32 %v1103
        %vm1163 = vweird.f32 %v1156
        %vm1164 = vmor %vm1162, %vm1163
        %v1165 = vsel %vm1164, %v1156, %v1161
        %v1166 = vrsqrt.pop %v1104
        %v1167 = vmul.f32 %v1166, %v1104
        %v1168 = vmul.f32 %v1167, %v1166
        %v1169 = vmul.f32 0.5, %v1168
        %v1170 = vsub.f32 1.5, %v1169
        %v1171 = vmul.f32 %v1166, %v1170
        %vm1172 = vweird.f32 %v1104
        %vm1173 = vweird.f32 %v1166
        %vm1174 = vmor %vm1172, %vm1173
        %v1175 = vsel %vm1174, %v1166, %v1171
        %v1176 = vrsqrt.pop %v1105
        %v1177 = vmul.f32 %v1176, %v1105
        %v1178 = vmul.f32 %v1177, %v1176
        %v1179 = vmul.f32 0.5, %v1178
        %v1180 = vsub.f32 1.5, %v1179
        %v1181 = vmul.f32 %v1176, %v1180
        %vm1182 = vweird.f32 %v1105
        %vm1183 = vweird.f32 %v1176
        %vm1184 = vmor %vm1182, %vm1183
        %v1185 = vsel %vm1184, %v1176, %v1181
        %v1186 = vmul.f32 %v1115, %v864
        %v1187 = vmul.f32 %v1125, %v866
        %v1188 = vmul.f32 %v1135, %v868
        %v1189 = vmul.f32 %v1145, %v870
        %v1190 = vmul.f32 %v1155, %v872
        %v1191 = vmul.f32 %v1165, %v874
        %v1192 = vmul.f32 %v1175, %v876
        %v1193 = vmul.f32 %v1185, %v878
        %v1194 = vmul.f32 %v1115, %v1058
        %v1195 = vmul.f32 %v1125, %v1059
        %v1196 = vmul.f32 %v1135, %v1060
        %v1197 = vmul.f32 %v1145, %v1061
        %v1198 = vmul.f32 %v1155, %v1062
        %v1199 = vmul.f32 %v1165, %v1063
        %v1200 = vmul.f32 %v1175, %v1064
        %v1201 = vmul.f32 %v1185, %v1065
        %v1202 = vld [vmem:[%s9] sm:$0x1]
        %v1204 = vperm.slane %v1202, 0
        %v1206 = vmul.f32 %v1194, %v1204
        %v1207 = vmul.f32 %v1195, %v1204
        %v1208 = vmul.f32 %v1196, %v1204
        %v1209 = vmul.f32 %v1197, %v1204
        %v1210 = vmul.f32 %v1198, %v1204
        %v1211 = vmul.f32 %v1199, %v1204
        %v1212 = vmul.f32 %v1200, %v1204
        %v1213 = vmul.f32 %v1201, %v1204
        %v1214 = vsub.f32 %v1186, %v1206
        %v1215 = vsub.f32 %v1187, %v1207
        %v1216 = vsub.f32 %v1188, %v1208
        %v1217 = vsub.f32 %v1189, %v1209
        %v1218 = vsub.f32 %v1190, %v1210
        %v1219 = vsub.f32 %v1191, %v1211
        %v1220 = vsub.f32 %v1192, %v1212
        %v1221 = vsub.f32 %v1193, %v1213
        %v1222 = vld [vmem:[%s10] sm:$0x1]
        %v1224 = vperm.slane %v1222, 0
        %v1226 = vadd.f32 %v1214, %v1224
        %v1227 = vadd.f32 %v1215, %v1224
        %v1228 = vadd.f32 %v1216, %v1224
        %v1229 = vadd.f32 %v1217, %v1224
        %v1230 = vadd.f32 %v1218, %v1224
        %v1231 = vadd.f32 %v1219, %v1224
        %v1232 = vadd.f32 %v1220, %v1224
        %v1233 = vadd.f32 %v1221, %v1224
        %vm1234 = vcmp.gt.f32.partialorder %v1226, 0.0
        %vm1235 = vcmp.gt.f32.partialorder %v1227, 0.0
        %vm1236 = vcmp.gt.f32.partialorder %v1228, 0.0
        %vm1237 = vcmp.gt.f32.partialorder %v1229, 0.0
        %vm1238 = vcmp.gt.f32.partialorder %v1230, 0.0
        %vm1239 = vcmp.gt.f32.partialorder %v1231, 0.0
        %vm1240 = vcmp.gt.f32.partialorder %v1232, 0.0
        %vm1241 = vcmp.gt.f32.partialorder %v1233, 0.0
        %v1242 = vmul.f32 %v1226, 0.01
        %v1243 = vmul.f32 %v1227, 0.01
        %v1244 = vmul.f32 %v1228, 0.01
        %v1245 = vmul.f32 %v1229, 0.01
        %v1246 = vmul.f32 %v1230, 0.01
        %v1247 = vmul.f32 %v1231, 0.01
        %v1248 = vmul.f32 %v1232, 0.01
        %v1249 = vmul.f32 %v1233, 0.01
        %v1250 = vsel %vm1234, %v1226, %v1242
        %v1251 = vsel %vm1235, %v1227, %v1243
        %v1252 = vsel %vm1236, %v1228, %v1244
        %v1253 = vsel %vm1237, %v1229, %v1245
        %v1254 = vsel %vm1238, %v1230, %v1246
        %v1255 = vsel %vm1239, %v1231, %v1247
        %v1256 = vsel %vm1240, %v1232, %v1248
        %v1257 = vsel %vm1241, %v1233, %v1249
        %1258 = vst [vmem:[%s440] sm:$0xff] %v1250
        %1259 = vst [vmem:[%s440 + $0x8] sm:$0xff] %v1251
        %1260 = vst [vmem:[%s440 + $0x10] sm:$0xff] %v1252
        %1261 = vst [vmem:[%s440 + $0x18] sm:$0xff] %v1253
        %1262 = vst [vmem:[%s440 + $0x20] sm:$0xff] %v1254
        %1263 = vst [vmem:[%s440 + $0x28] sm:$0xff] %v1255
        %1264 = vst [vmem:[%s440 + $0x30] sm:$0xff] %v1256
        %1265 = vst [vmem:[%s440 + $0x38] sm:$0xff] %v1257
        %v1266 = vld [vmem:[%s8] sm:$0xff]
        %v1267 = vld [vmem:[%s8 + $0x8] sm:$0xff]
        %v1268 = vld [vmem:[%s8 + $0x10] sm:$0xff]
        %v1269 = vld [vmem:[%s8 + $0x18] sm:$0xff]
        %v1270 = vld [vmem:[%s8 + $0x20] sm:$0xff]
        %v1271 = vld [vmem:[%s8 + $0x28] sm:$0xff]
        %v1272 = vld [vmem:[%s8 + $0x30] sm:$0xff]
        %v1273 = vld [vmem:[%s8 + $0x38] sm:$0xff]
        %v1274 = vld [vmem:[%s8 + $0x40] sm:$0xff]
        %v1275 = vld [vmem:[%s8 + $0x48] sm:$0xff]
        %v1276 = vld [vmem:[%s8 + $0x50] sm:$0xff]
        %v1277 = vld [vmem:[%s8 + $0x58] sm:$0xff]
        %v1278 = vld [vmem:[%s8 + $0x60] sm:$0xff]
        %v1279 = vld [vmem:[%s8 + $0x68] sm:$0xff]
        %v1280 = vld [vmem:[%s8 + $0x70] sm:$0xff]
        %v1281 = vld [vmem:[%s8 + $0x78] sm:$0xff]
        %1282 = vmatpush.msra.mxu0 %v1281
        %1283 = vmatpush.msra.mxu0 %v1280
        %1284 = vmatpush.msra.mxu0 %v1279
        %1285 = vmatpush.msra.mxu0 %v1278
        %1286 = vmatpush.msra.mxu0 %v1277
        %1287 = vmatpush.msra.mxu0 %v1276
        %1288 = vmatpush.msra.mxu0 %v1275
        %1289 = vmatpush.msra.mxu0 %v1274
        %1290 = vmatpush.msra.mxu0 %v1273
        %1291 = vmatpush.msra.mxu0 %v1272
        %1292 = vmatpush.msra.mxu0 %v1271
        %1293 = vmatpush.msra.mxu0 %v1270
        %1294 = vmatpush.msra.mxu0 %v1269
        %1295 = vmatpush.msra.mxu0 %v1268
        %1296 = vmatpush.msra.mxu0 %v1267
        %1297 = vmatpush.msra.mxu0 %v1266
        %1298 = vmatmul.f32.gmra.mxu0 %v1250
        %v1299 = vpop.f32.mrf.mxu0
        %v1300 = vadd.f32 0.0, %v1299
        %1301 = vmatmul.f32.gmra.mxu0 %v1251
        %v1302 = vpop.f32.mrf.mxu0
        %v1303 = vadd.f32 0.0, %v1302
        %1304 = vmatmul.f32.gmra.mxu0 %v1252
        %v1305 = vpop.f32.mrf.mxu0
        %v1306 = vadd.f32 0.0, %v1305
        %1307 = vmatmul.f32.gmra.mxu0 %v1253
        %v1308 = vpop.f32.mrf.mxu0
        %v1309 = vadd.f32 0.0, %v1308
        %1310 = vmatmul.f32.gmra.mxu0 %v1254
        %v1311 = vpop.f32.mrf.mxu0
        %v1312 = vadd.f32 0.0, %v1311
        %1313 = vmatmul.f32.gmra.mxu0 %v1255
        %v1314 = vpop.f32.mrf.mxu0
        %v1315 = vadd.f32 0.0, %v1314
        %1316 = vmatmul.f32.gmra.mxu0 %v1256
        %v1317 = vpop.f32.mrf.mxu0
        %v1318 = vadd.f32 0.0, %v1317
        %1319 = vmatmul.f32.gmra.mxu0 %v1257
        %v1320 = vpop.f32.mrf.mxu0
        %v1321 = vadd.f32 0.0, %v1320
        %1322 = vdwg.mxu0
        %vm1323 = vcmask 31744
        %1324 = vst.msk [vmem:[%s471] sm:$0xff] %vm1323, %v1300
        %1325 = vst.msk [vmem:[%s471 + $0x8] sm:$0xff] %vm1323, %v1303
        %1326 = vst.msk [vmem:[%s471 + $0x10] sm:$0xff] %vm1323, %v1306
        %1327 = vst.msk [vmem:[%s471 + $0x18] sm:$0xff] %vm1323, %v1309
        %1328 = vst.msk [vmem:[%s471 + $0x20] sm:$0xff] %vm1323, %v1312
        %1329 = vst.msk [vmem:[%s471 + $0x28] sm:$0xff] %vm1323, %v1315
        %1330 = vst.msk [vmem:[%s471 + $0x30] sm:$0xff] %vm1323, %v1318
        %1331 = vst.msk [vmem:[%s471 + $0x38] sm:$0xff] %vm1323, %v1321
        %s1332 = sand.u32 %s281, 1
        %s1333 = scalar_lea.sflag [#allocation3], %s1332
        %s1334 = sand.u32 %s281, 1
        %s1335 = smul.addr %s1334, 64
        %s1336 = scalar_lea.vmem [#allocation2], %s1335
        %s1337 = smul.u32 8, %s27
        %p1338 = scmp.lt.s32.totalorder %s1337, 31
        %s1339 = scalar_select %p1338, %s1337, 31
        %s1340 = smul.addr %s1339, 8
        %s1341 = scalar_lea.vmem %s12, %s1340
        // Predicated region
        $region65: #{tpu_custom_call.1} parent=63 // pred_check
          %p1342 = pneg %p291
        $region66: #{tpu_custom_call.1} parent=63 // pred_check_branch
          %1344 = sbr.rel (%p1342) target = $region68
        $region67: #{tpu_custom_call.1} parent=63 // pred_region
          %s1345 = smul.u32 8, %s27
          %1347 = vsyncadd %s1333, 0
          %s1348 = smul.addr %s1345, 8
          %s1349 = scalar_lea.hbm %s11, %s1348
          %s1350 = sshll.u32 %s1336, 4
          %s1351 = int_to_ptr.vmem [resolvable:$true] %s1350
          %s1352 = sshll.u32 %s1349, 4
          %s1353 = int_to_ptr.hbm [resolvable:$true] %s1352
          %1358 = dma.vmem_to_hbm [thread:$0]  %s1351, 1024, %s1353, %s1333, 128, 128, 8
        $region68: #{tpu_custom_call.1} parent=63 // pred_fallthru
          _
        // Predicated region
        $region69: #{tpu_custom_call.1} parent=63 // pred_check
          %p1359 = pneg %p317
        $region70: #{tpu_custom_call.1} parent=63 // pred_check_branch
          %1361 = sbr.rel (%p1359) target = $region72
        $region71: #{tpu_custom_call.1} parent=63 // pred_region
          %s1362 = smul.u32 8, %s27
        $region72: #{tpu_custom_call.1} parent=63 // pred_fallthru
          _
      $region64: #{tpu_custom_call.1} parent=5 // pred_fallthru
        _
      %p1363 = scmp.le.s32.totalorder 2, %s22
      // Predicated region
      $region73: #{tpu_custom_call.1} parent=5 // pred_check
        %p1364 = pneg %p1363
      $region74: #{tpu_custom_call.1} parent=5 // pred_check_branch
        %1366 = sbr.rel (%p1364) target = $region76
      $region75: #{tpu_custom_call.1} parent=5 // pred_region
        %s1367 = ssub.s32 %s22, 2
        // Predicated region
        $region77: #{tpu_custom_call.1} parent=75 // pred_check
          %p1368 = pneg %p297
        $region78: #{tpu_custom_call.1} parent=75 // pred_check_branch
          %1370 = sbr.rel (%p1368) target = $region80
        $region79: #{tpu_custom_call.1} parent=75 // pred_region
          %s1371 = sand.u32 %s282, 1
          %s1372 = scalar_lea.sflag [#allocation3], %s1371
          %s1373 = sand.u32 %s282, 1
          %s1374 = smul.addr %s1373, 64
          %s1375 = scalar_lea.vmem [#allocation2], %s1374
          %1377 = dma.done %s1372, 1024
        $region80: #{tpu_custom_call.1} parent=75 // pred_fallthru
          _
        // Predicated region
        $region81: #{tpu_custom_call.1} parent=75 // pred_check
          %p1378 = pneg %p323
        $region82: #{tpu_custom_call.1} parent=75 // pred_check_branch
          %1380 = sbr.rel (%p1378) target = $region84
        $region83: #{tpu_custom_call.1} parent=75 // pred_region
          %s1381 = smul.u32 8, %s28
          %p1382 = scmp.lt.s32.totalorder %s1381, 31
          %s1383 = scalar_select %p1382, %s1381, 31
          %s1384 = smul.addr %s1383, 8
          %s1385 = scalar_lea.vmem %s12, %s1384
        $region84: #{tpu_custom_call.1} parent=75 // pred_fallthru
          _
      $region76: #{tpu_custom_call.1} parent=5 // pred_fallthru
        _
    $region6: #{tpu_custom_call.1} parent=1 // loop_footer
      %s26 = sadd.s32 1, %s22
    $region7: #{tpu_custom_call.1} parent=1 // loop_footer_branch
      %21 = sbr.rel target = $region3
    $region8: #{tpu_custom_call.1} parent=1 // loop_exit
      _
    %1386 = vsyncpa [#allocation3], 1
    %s1387 = scalar_lea.sflag [#allocation3], 1
    %1388 = vsyncpa %s1387, 1

</llo_original>
